<compile_context>
chip_gen: v5e
topology: v5e:2x2
jax: 0.10.0
libtpu: 0.0.40
codegen_flags: <defaults>
</compile_context>

<pallas_src>
import functools

import jax
import jax.numpy as jnp
from jax import lax
from jax.experimental import pallas as pl
from jax.experimental.pallas import tpu as pltpu

EPS = 1e-12  # F.normalize default eps


def tesnet_kernel(f_ref, w1t_ref, b1_ref, protot_ref, wct_ref,
                  logits_ref, cosmin_ref, *, n_spatial, tile_b):
    """One grid step = `tile_b` batch elements, M = tile_b * n_spatial rows.

    f_ref:      (M, Cin)           backbone features (f32 or bf16)
    w1t_ref:    (Cin, D)           conv_1x1 weight^T (matmul dtype)
    b1_ref:     (1, D)             conv_1x1 bias (f32)
    protot_ref: (D, Ppad)          L2-normalized prototypes^T, zero-padded cols
    wct_ref:    (Ppad, Cpad)       classifier weight^T, zero-padded (f32)
    logits_ref: (1, tile_b, Cpad)
    cosmin_ref: (1, tile_b, Ppad)
    """
    f = f_ref[...]                                                   # (M, Cin)

    # conv_1x1 (1x1 conv == channel matmul) + bias; bf16/f32 inputs, f32 acc.
    z = jnp.dot(f, w1t_ref[...],
                preferred_element_type=jnp.float32) + b1_ref[...]    # (M, D) f32

    # One matmul serves both project_to_basis and cosine_dist.
    z_mm = z.astype(protot_ref.dtype)       # no-op in the f32 path
    proj = jnp.dot(z_mm, protot_ref[...],
                   preferred_element_type=jnp.float32)               # (M, Ppad)

    # cosine = proj / max(||z||, eps)  ==  proj * rsqrt(max(||z||^2, eps^2))
    sumsq = jnp.sum(z * z, axis=-1, keepdims=True)                   # (M, 1)
    inv_norm = lax.rsqrt(jnp.maximum(sumsq, EPS * EPS))              # EUP slot
    cos = proj * inv_norm                                            # (M, Ppad)

    ppad = proj.shape[-1]
    # Pure-view reshape: n_spatial % 8 == 0 keeps batch-row groups on sublane
    # boundaries (no relayout copy).  TODO(synk): replace with a fori_loop over
    # pl.ds(b*n_spatial, n_spatial) windows if a config has n_spatial % 8 != 0.
    proj_b = proj.reshape(tile_b, n_spatial, ppad)
    cos_b = cos.reshape(tile_b, n_spatial, ppad)

    # max_pool2d over the full spatial extent of (-cos): max(-cos) == -min(cos)
    cosmin_ref[0, :, :] = -jnp.min(cos_b, axis=1)                    # (tile_b, Ppad)
    proj_max = jnp.max(proj_b, axis=1)                               # (tile_b, Ppad)

    # classifier (Linear, no bias) — tiny, kept in f32.
    logits_ref[0, :, :] = jnp.dot(proj_max, wct_ref[...],
                                  preferred_element_type=jnp.float32)


def _round_up(x, m):
    return ((x + m - 1) // m) * m


def _choose_tile_b(batch, n_spatial, target_rows=512):
    """Pick tile_b so tile_b*N ~ target_rows (MXU-sized M, multiple of 256 when
    N allows), tile_b divides batch (no partial tiles), and the grid has >= 2
    steps (DMA pipelining + both v7x TensorCores)."""
    cand = min(batch, max(1, target_rows // max(n_spatial, 1)))
    while batch % cand != 0:
        cand -= 1
    if cand == batch and batch > 1:
        cand = batch // 2
        while batch % cand != 0:
            cand -= 1
    return max(cand, 1)


def tesnet_pallas(f_feat_nhwc, w1, b1, proto, wc, *, matmul_dtype=jnp.float32):
    """f_feat_nhwc: (B, H, W, Cin) backbone features (channel-last).
    w1: (D, Cin) conv_1x1 weight (squeezed 1x1), b1: (D,),
    proto: (P, D) prototype vectors (un-normalized, squeezed 1x1),
    wc: (C, P) classifier weight.
    Returns (logits (B, C), cosine_min_distances (B, P))."""
    B, H, W, Cin = f_feat_nhwc.shape
    N = H * W
    D = w1.shape[0]
    P, C = proto.shape[0], wc.shape[0]

    # Lane-dense outputs: pad prototype / class minor dims to 128-lane tiles.
    Ppad = _round_up(max(P, 128), 128)
    Cpad = _round_up(max(C, 128), 128)

    tile_b = _choose_tile_b(B, N)
    assert B % tile_b == 0, \
        "TODO(synk): add row masking before allowing partial batch tiles"
    num_tiles = B // tile_b
    M = tile_b * N
    assert M % 8 == 0, "feature block rows must be sublane-aligned"

    # ---- parameter prep (tiny, batch-independent; hoisted out of the kernel) ----
    proto_n = proto / jnp.maximum(
        jnp.linalg.norm(proto, axis=1, keepdims=True), EPS)
    w1t = jnp.transpose(w1).astype(matmul_dtype)                     # (Cin, D)
    b1_k = b1.reshape(1, D).astype(jnp.float32)
    protot = jnp.zeros((D, Ppad), matmul_dtype).at[:, :P].set(
        jnp.transpose(proto_n).astype(matmul_dtype))                 # (D, Ppad)
    wct = jnp.zeros((Ppad, Cpad), jnp.float32).at[:P, :C].set(
        jnp.transpose(wc))                                           # (Ppad, Cpad)

    # channel-last features -> row-major (B*N, Cin): reshape is free; the bf16
    # cast (when enabled) also halves the dominant HBM->VMEM DMA.
    f2d = f_feat_nhwc.reshape(B * N, Cin).astype(matmul_dtype)

    # VMEM budget per grid step (double-buffered blocks + f32 intermediates);
    # keep the scoped limit explicit so scaled configs stay under v7x's 64 MiB.
    in_bytes = jnp.dtype(matmul_dtype).itemsize
    vmem_est = (2 * M * Cin * in_bytes                       # feature block x2
                + 2 * (Cin * D + D * Ppad) * in_bytes        # matmul weights x2
                + 2 * (D + Ppad * Cpad) * 4                  # bias + classifier x2
                + 2 * tile_b * (Cpad + Ppad) * 4             # output blocks x2
                + 2 * M * (D + 2 * Ppad + 2) * 4)            # z, proj, cos, norms
    vmem_limit = int(min(100 * 2 ** 20, max(32 * 2 ** 20, 2 * vmem_est)))

    kernel = functools.partial(tesnet_kernel, n_spatial=N, tile_b=tile_b)

    logits_p, cosmin_p = pl.pallas_call(
        kernel,
        out_shape=(jax.ShapeDtypeStruct((num_tiles, tile_b, Cpad), jnp.float32),
                   jax.ShapeDtypeStruct((num_tiles, tile_b, Ppad), jnp.float32)),
        grid_spec=pltpu.PrefetchScalarGridSpec(
            num_scalar_prefetch=0,
            grid=(num_tiles,),
            in_specs=[
                # Feature slab: one tile_b*N row block per step, pipelined.
                pl.BlockSpec((M, Cin), lambda i: (i, 0)),
                # Weights: constant block index -> not re-fetched across steps.
                pl.BlockSpec((Cin, D), lambda i: (0, 0)),
                pl.BlockSpec((1, D), lambda i: (0, 0)),
                pl.BlockSpec((D, Ppad), lambda i: (0, 0)),
                pl.BlockSpec((Ppad, Cpad), lambda i: (0, 0)),
            ],
            out_specs=[
                pl.BlockSpec((1, tile_b, Cpad), lambda i: (i, 0, 0)),
                pl.BlockSpec((1, tile_b, Ppad), lambda i: (i, 0, 0)),
            ],
        ),
        compiler_params=pltpu.CompilerParams(
            dimension_semantics=("parallel",),
            vmem_limit_bytes=vmem_limit),
    )(f2d, w1t, b1_k, protot, wct)

    logits = logits_p.reshape(B, Cpad)[:, :C]
    cosmin = cosmin_p.reshape(B, Ppad)[:, :P]
    return logits, cosmin


def backbone_standin(x_nchw, bw, bb):
    # TODO(synk): real TesNet uses a ResNet backbone (external module); this is
    # a deterministic single-conv + ReLU stand-in.  Emits NHWC so the kernel
    # wrapper needs no HBM transpose.
    f = lax.conv_general_dilated(
        x_nchw, bw, window_strides=(2, 2), padding="SAME",
        dimension_numbers=("NCHW", "OIHW", "NHWC"))
    return jax.nn.relu(f + bb[None, None, None, :])


def reference_forward(x, params):
    """Pure-JAX reference replicating the PyTorch forward semantics."""
    f = backbone_standin(x, params["bw"], params["bb"])        # (B, H, W, Cin)
    w1, b1 = params["w1"], params["b1"]                        # (D, Cin), (D,)
    proto, wc = params["proto"], params["wc"]                  # (P, D), (C, P)
    # conv_1x1
    z = jnp.einsum("bhwc,dc->bhwd", f, w1) + b1                # (B, H, W, D)
    # normalize prototypes (dim=1 of (P, D, 1, 1) == D axis)
    proto_n = proto / jnp.maximum(
        jnp.linalg.norm(proto, axis=1, keepdims=True), EPS)
    # cosine_dist: normalize features over channels, conv with prototypes
    z_n = z / jnp.maximum(jnp.linalg.norm(z, axis=-1, keepdims=True), EPS)
    cos = jnp.einsum("bhwd,pd->bhwp", z_n, proto_n)
    cosmin = jnp.max(-cos, axis=(1, 2))                        # (B, P)
    # project_to_basis + global max pool
    proj = jnp.einsum("bhwd,pd->bhwp", z, proto_n)
    proj_max = jnp.max(proj, axis=(1, 2))                      # (B, P)
    logits = proj_max @ wc.T                                   # (B, C)
    return logits, cosmin


if __name__ == "__main__":
    # Small synthetic config.  B=32 (16x16 images, stride-2 backbone -> 8x8=64
    # spatial positions) gives a 4-step pipelined grid with 512 rows per step.
    B, C_IN_IMG, IMG = 32, 3, 16
    CIN_FEAT = 32          # backbone output channels (conv_1x1 in_channels)
    D = 128                # prototype_dim
    NUM_CLASSES = 8
    PROTOS_PER_CLASS = 4
    P = NUM_CLASSES * PROTOS_PER_CLASS

    key = jax.random.PRNGKey(0)
    k = jax.random.split(key, 6)

    x = jax.random.normal(k[0], (B, C_IN_IMG, IMG, IMG), jnp.float32)

    # stand-in backbone conv (3x3, stride 2)
    bw = 0.1 * jax.random.normal(k[1], (CIN_FEAT, C_IN_IMG, 3, 3), jnp.float32)
    bb = jnp.zeros((CIN_FEAT,), jnp.float32)

    # conv_1x1: kaiming_normal_(fan_out, relu) -> std = sqrt(2 / fan_out)
    fan_out = D * 1 * 1
    w1 = jax.random.normal(k[2], (D, CIN_FEAT), jnp.float32) * jnp.sqrt(2.0 / fan_out)
    b1 = jnp.zeros((D,), jnp.float32)                    # constant_(bias, 0)

    # prototype_vectors ~ U[0, 1)
    proto = jax.random.uniform(k[3], (P, D), jnp.float32)

    # classifier Linear(P, C, bias=False): U(-1/sqrt(P), 1/sqrt(P))
    bound = 1.0 / jnp.sqrt(P)
    wc = jax.random.uniform(k[4], (NUM_CLASSES, P), jnp.float32,
                            minval=-bound, maxval=bound)

    params = dict(bw=bw, bb=bb, w1=w1, b1=b1, proto=proto, wc=wc)

    # backbone (plain-JAX glue, NHWC output) then Pallas kernel for the head
    feat = backbone_standin(x, bw, bb)
    ref_logits, ref_cosmin = reference_forward(x, params)

    # ---- f32 path: exact parity with the f32 reference ----
    logits, cosmin = tesnet_pallas(feat, w1, b1, proto, wc,
                                   matmul_dtype=jnp.float32)
    logits = jax.block_until_ready(logits)
    cosmin = jax.block_until_ready(cosmin)
    assert jnp.allclose(logits, ref_logits, atol=1e-4, rtol=1e-4), \
        f"f32 logits mismatch: {jnp.max(jnp.abs(logits - ref_logits))}"
    assert jnp.allclose(cosmin, ref_cosmin, atol=1e-4, rtol=1e-4), \
        f"f32 cosine_min mismatch: {jnp.max(jnp.abs(cosmin - ref_cosmin))}"

    # ---- bf16-MXU path (f32 accumulation): loose tolerance for bf16 rounding ----
    logits_bf, cosmin_bf = tesnet_pallas(feat, w1, b1, proto, wc,
                                         matmul_dtype=jnp.bfloat16)
    logits_bf = jax.block_until_ready(logits_bf)
    cosmin_bf = jax.block_until_ready(cosmin_bf)
    assert jnp.allclose(logits_bf, ref_logits, atol=1e-1, rtol=1e-1), \
        f"bf16 logits mismatch: {jnp.max(jnp.abs(logits_bf - ref_logits))}"
    assert jnp.allclose(cosmin_bf, ref_cosmin, atol=1e-1, rtol=1e-1), \
        f"bf16 cosine_min mismatch: {jnp.max(jnp.abs(cosmin_bf - ref_cosmin))}"

    print("KERNEL_OK")
</pallas_src>

<mosaic_0001>
module attributes {stable_mosaic.version = 11 : i64} {
  func.func @tesnet_kernel(%arg0: i32, %arg1: memref<512x32xf32, #tpu.memory_space<vmem>>, %arg2: memref<32x128xf32, #tpu.memory_space<vmem>>, %arg3: memref<1x128xf32, #tpu.memory_space<vmem>>, %arg4: memref<128x128xf32, #tpu.memory_space<vmem>>, %arg5: memref<128x128xf32, #tpu.memory_space<vmem>>, %arg6: memref<1x8x128xf32, #tpu.memory_space<vmem>>, %arg7: memref<1x8x128xf32, #tpu.memory_space<vmem>>) attributes {dimension_semantics = [#tpu.dimension_semantics<parallel>], iteration_bounds = array<i64: 4>, scalar_prefetch = 0 : i64, scratch_operands = 0 : i64, tpu.core_type = #tpu.core_type<tc>, window_params = [{transform_indices = @transform_0, window_bounds = array<i64: 512, 32>}, {pipeline_mode = #tpu.pipeline_mode<synchronous>, transform_indices = @transform_1, window_bounds = array<i64: 32, 128>}, {pipeline_mode = #tpu.pipeline_mode<synchronous>, transform_indices = @transform_2, window_bounds = array<i64: 1, 128>}, {pipeline_mode = #tpu.pipeline_mode<synchronous>, transform_indices = @transform_3, window_bounds = array<i64: 128, 128>}, {pipeline_mode = #tpu.pipeline_mode<synchronous>, transform_indices = @transform_4, window_bounds = array<i64: 128, 128>}, {transform_indices = @transform_5, window_bounds = array<i64: 1, 8, 128>}, {transform_indices = @transform_6, window_bounds = array<i64: 1, 8, 128>}]} {
    %c0 = arith.constant 0 : index
    %c0_0 = arith.constant 0 : index
    %0 = vector.load %arg1[%c0, %c0_0] : memref<512x32xf32, #tpu.memory_space<vmem>>, vector<512x32xf32>
    %c0_1 = arith.constant 0 : index
    %c0_2 = arith.constant 0 : index
    %1 = vector.load %arg2[%c0_1, %c0_2] : memref<32x128xf32, #tpu.memory_space<vmem>>, vector<32x128xf32>
    %cst = arith.constant dense<0.000000e+00> : vector<512x128xf32>
    %2 = tpu.matmul %0, %1, %cst {dimension_numbers = #tpu.dot_dimension_numbers<[1], [0], [0], [1], [0, 0, 1, 1], [], []>} : vector<512x32xf32>, vector<32x128xf32>, vector<512x128xf32> -> vector<512x128xf32>
    %c0_3 = arith.constant 0 : index
    %c0_4 = arith.constant 0 : index
    %3 = vector.load %arg3[%c0_3, %c0_4] : memref<1x128xf32, #tpu.memory_space<vmem>>, vector<1x128xf32>
    %4 = vector.broadcast %3 : vector<1x128xf32> to vector<512x128xf32>
    %5 = arith.addf %2, %4 : vector<512x128xf32>
    %c0_5 = arith.constant 0 : index
    %c0_6 = arith.constant 0 : index
    %6 = vector.load %arg4[%c0_5, %c0_6] : memref<128x128xf32, #tpu.memory_space<vmem>>, vector<128x128xf32>
    %cst_7 = arith.constant dense<0.000000e+00> : vector<512x128xf32>
    %7 = tpu.matmul %5, %6, %cst_7 {dimension_numbers = #tpu.dot_dimension_numbers<[1], [0], [0], [1], [0, 0, 1, 1], [], []>} : vector<512x128xf32>, vector<128x128xf32>, vector<512x128xf32> -> vector<512x128xf32>
    %8 = arith.mulf %5, %5 : vector<512x128xf32>
    %cst_8 = arith.constant dense<0.000000e+00> : vector<512xf32>
    %9 = vector.multi_reduction <add>, %8, %cst_8 [1] : vector<512x128xf32> to vector<512xf32>
    %10 = vector.shape_cast %9 : vector<512xf32> to vector<512x1xf32>
    %cst_9 = arith.constant 1.000000e-24 : f32
    %11 = vector.broadcast %cst_9 : f32 to vector<512x1xf32>
    %12 = arith.maximumf %10, %11 : vector<512x1xf32>
    %13 = math.rsqrt %12 : vector<512x1xf32>
    %14 = vector.broadcast %13 : vector<512x1xf32> to vector<512x128xf32>
    %15 = arith.mulf %7, %14 : vector<512x128xf32>
    %16 = vector.shape_cast %7 : vector<512x128xf32> to vector<8x64x128xf32>
    %17 = vector.shape_cast %15 : vector<512x128xf32> to vector<8x64x128xf32>
    %cst_10 = arith.constant dense<0x7F800000> : vector<8x128xf32>
    %18 = vector.multi_reduction <minimumf>, %17, %cst_10 [1] : vector<8x64x128xf32> to vector<8x128xf32>
    %cst_11 = arith.constant 0.000000e+00 : f32
    %19 = vector.broadcast %cst_11 : f32 to vector<8x128xf32>
    %20 = arith.subf %19, %18 : vector<8x128xf32>
    %c0_12 = arith.constant 0 : index
    %c0_13 = arith.constant 0 : index
    %c0_14 = arith.constant 0 : index
    %21 = vector.load %arg7[%c0_12, %c0_13, %c0_14] : memref<1x8x128xf32, #tpu.memory_space<vmem>>, vector<1x8x128xf32>
    %22 = vector.shape_cast %21 : vector<1x8x128xf32> to vector<8x128xf32>
    %23 = vector.shape_cast %20 : vector<8x128xf32> to vector<1x8x128xf32>
    tpu.vector_store %arg7[%c0_12, %c0_13, %c0_14], %23 {strides = array<i32>} : memref<1x8x128xf32, #tpu.memory_space<vmem>>, vector<1x8x128xf32>,
    %cst_15 = arith.constant dense<0xFF800000> : vector<8x128xf32>
    %24 = vector.multi_reduction <maximumf>, %16, %cst_15 [1] : vector<8x64x128xf32> to vector<8x128xf32>
    %c0_16 = arith.constant 0 : index
    %c0_17 = arith.constant 0 : index
    %25 = vector.load %arg5[%c0_16, %c0_17] : memref<128x128xf32, #tpu.memory_space<vmem>>, vector<128x128xf32>
    %cst_18 = arith.constant dense<0.000000e+00> : vector<8x128xf32>
    %26 = tpu.matmul %24, %25, %cst_18 {dimension_numbers = #tpu.dot_dimension_numbers<[1], [0], [0], [1], [0, 0, 1, 1], [], []>} : vector<8x128xf32>, vector<128x128xf32>, vector<8x128xf32> -> vector<8x128xf32>
    %c0_19 = arith.constant 0 : index
    %c0_20 = arith.constant 0 : index
    %c0_21 = arith.constant 0 : index
    %27 = vector.load %arg6[%c0_19, %c0_20, %c0_21] : memref<1x8x128xf32, #tpu.memory_space<vmem>>, vector<1x8x128xf32>
    %28 = vector.shape_cast %27 : vector<1x8x128xf32> to vector<8x128xf32>
    %29 = vector.shape_cast %26 : vector<8x128xf32> to vector<1x8x128xf32>
    tpu.vector_store %arg6[%c0_19, %c0_20, %c0_21], %29 {strides = array<i32>} : memref<1x8x128xf32, #tpu.memory_space<vmem>>, vector<1x8x128xf32>,
    return
  }
  func.func @transform_0(%arg0: i32) -> (i32, i32) {
    %c0_i32 = arith.constant 0 : i32
    %c0_i32_0 = arith.constant 0 : i32
    return %arg0, %c0_i32 : i32, i32
  }
  func.func @transform_1(%arg0: i32) -> (i32, i32) {
    %c0_i32 = arith.constant 0 : i32
    %c0_i32_0 = arith.constant 0 : i32
    %c0_i32_1 = arith.constant 0 : i32
    return %c0_i32, %c0_i32_0 : i32, i32
  }
  func.func @transform_2(%arg0: i32) -> (i32, i32) {
    %c0_i32 = arith.constant 0 : i32
    %c0_i32_0 = arith.constant 0 : i32
    %c0_i32_1 = arith.constant 0 : i32
    return %c0_i32, %c0_i32_0 : i32, i32
  }
  func.func @transform_3(%arg0: i32) -> (i32, i32) {
    %c0_i32 = arith.constant 0 : i32
    %c0_i32_0 = arith.constant 0 : i32
    %c0_i32_1 = arith.constant 0 : i32
    return %c0_i32, %c0_i32_0 : i32, i32
  }
  func.func @transform_4(%arg0: i32) -> (i32, i32) {
    %c0_i32 = arith.constant 0 : i32
    %c0_i32_0 = arith.constant 0 : i32
    %c0_i32_1 = arith.constant 0 : i32
    return %c0_i32, %c0_i32_0 : i32, i32
  }
  func.func @transform_5(%arg0: i32) -> (i32, i32, i32) {
    %c0_i32 = arith.constant 0 : i32
    %c0_i32_0 = arith.constant 0 : i32
    %c0_i32_1 = arith.constant 0 : i32
    return %arg0, %c0_i32, %c0_i32_0 : i32, i32, i32
  }
  func.func @transform_6(%arg0: i32) -> (i32, i32, i32) {
    %c0_i32 = arith.constant 0 : i32
    %c0_i32_0 = arith.constant 0 : i32
    %c0_i32_1 = arith.constant 0 : i32
    return %arg0, %c0_i32, %c0_i32_0 : i32, i32, i32
  }
}

</mosaic_0001>

<llo_original>
// kernel: tpu_custom_call.1
$region0: #{tpu_custom_call.1}
  #allocation0 [shape = 'u32[]', space=smem, size = 0x4, offset = 0x4, fixed_abs, tag = 'smem constant byte address 0x4 - core index']
  #allocation1 [shape = 'u32[72,128]{1,0:T(1,128)}', space=vmem, size = 0x9000, scoped, tag = 'internal scratch']
  %s0 = inlined_call_operand.vmem [shape: f32[2048,32], index: 0, kind: input, shape index: {}]
  %s1 = inlined_call_operand.vmem [shape: f32[32,128], index: 1, kind: input, shape index: {}]
  %s2 = inlined_call_operand.vmem [shape: f32[1,128], index: 2, kind: input, shape index: {}]
  %s3 = inlined_call_operand.vmem [shape: f32[128,128], index: 3, kind: input, shape index: {}]
  %s4 = inlined_call_operand.vmem [shape: f32[128,128], index: 4, kind: input, shape index: {}]
  %s5 = inlined_call_operand.hbm [shape: f32[4,8,128], index: 5, kind: output, shape index: {0}]
  %s6 = inlined_call_operand.hbm [shape: f32[4,8,128], index: 6, kind: output, shape index: {1}]
  %7 = xla_tuple %s5, %s6
  %s8 = sld [smem:[#allocation0]]
  $region61: #{tpu_custom_call.1} parent=0
    _
  %s10 = ssub.s32 1, %s8
  %s11 = scalar_select 0, %s10, %s8
  $region1: #{tpu_custom_call.1} parent=0
    #allocation2 [shape = 'u8[8192]{0}', space=vmem, size = 0x2000, scoped, tag = 'output window, operand 0']
    #allocation3 [shape = 's32[2]{0}', space=sflag, size = 0x8, scoped, tag = 'scoped memory for tpu_custom_call.1']
    #allocation4 [shape = 'u8[8192]{0}', space=vmem, size = 0x2000, scoped, tag = 'output window, operand 1']
    #allocation5 [shape = 's32[2]{0}', space=sflag, size = 0x8, scoped, tag = 'scoped memory for tpu_custom_call.1']
    %12 = vsyncpa [#allocation3], 0
    %s13 = scalar_lea.sflag [#allocation3], 1
    %14 = vsyncpa %s13, 0
    %15 = vsyncpa [#allocation5], 0
    %s16 = scalar_lea.sflag [#allocation5], 1
    %17 = vsyncpa %s16, 0
    loop: start=0, step=1, limit=6
    $region2: #{tpu_custom_call.1} parent=1 // loop_pre_header
      _
    $region3: #{tpu_custom_call.1} parent=1 // loop_header
      %s19 = sphi 0, %s23
      %p20 = scmp.ge.s32.totalorder %s19, 6
      %s29 = sphi 0, %s31
      %s32 = sphi 0, %s29
      %s33 = sphi 0, %s32
      %s49 = sphi 0, %s33
      %s53 = sphi 0, %s53
      %s55 = sphi 0, %s53
      %s56 = sphi 0, %s55
      %s70 = sphi 0, %s56
      %s74 = sphi 0, %s74
      %s76 = sphi 0, %s74
      %s77 = sphi 0, %s76
      %s91 = sphi 0, %s77
      %s95 = sphi 0, %s95
      %s97 = sphi 0, %s95
      %s98 = sphi 0, %s97
      %s112 = sphi 0, %s98
      %s116 = sphi 0, %s116
      %s118 = sphi 0, %s116
      %s119 = sphi 0, %s118
      %s133 = sphi 0, %s119
      %s139 = sphi 0, %s141
      %s142 = sphi 0, %s139
      %s143 = sphi 0, %s142
      %s159 = sphi 0, %s143
      %s165 = sphi 0, %s167
      %s168 = sphi 0, %s165
      %s169 = sphi 0, %s168
      %s185 = sphi 0, %s169
    $region4: #{tpu_custom_call.1} parent=1 // loop_header_branch
      %22 = sbr.rel (%p20) target = $region8
    $region5: #{tpu_custom_call.1} parent=1 // loop_body
      %s24 = ssub.s32 %s19, 1
      %s25 = ssub.s32 %s19, 2
      %s26 = sadd.s32 %s19, 1
      %s27 = ssub.s32 %s19, %s26
      %p28 = scmp.eq.s32.totalorder %s27, 0
      %s30 = sadd.s32 %s29, 1
      %s31 = scalar_select %p28, %s29, %s30
      %p34 = pneg %p28
      %p35 = scmp.eq.s32.totalorder %s19, 3
      %p36 = por %p34, %p35
      %p37 = scmp.ne.s32.totalorder %s29, %s32
      %p38 = scmp.eq.s32.totalorder %s19, 0
      %p39 = por %p37, %p38
      %p40 = scmp.ne.s32.totalorder %s29, %s32
      %p41 = scmp.eq.s32.totalorder %s24, 3
      %p42 = por %p40, %p41
      %p43 = scmp.ne.s32.totalorder %s32, %s33
      %p44 = scmp.eq.s32.totalorder %s24, 0
      %p45 = por %p43, %p44
      %p46 = scmp.ne.s32.totalorder %s32, %s33
      %p47 = scmp.eq.s32.totalorder %s25, 3
      %p48 = por %p46, %p47
      %p50 = scmp.ne.s32.totalorder %s33, %s49
      %p51 = scmp.eq.s32.totalorder %s25, 0
      %p52 = por %p50, %p51
      %s54 = sadd.s32 %s53, 1
      %p57 = scmp.eq.s32.totalorder %s19, 3
      %p58 = scmp.ne.s32.totalorder %s53, %s55
      %p59 = scmp.eq.s32.totalorder %s19, 0
      %p60 = por %p58, %p59
      %p61 = scmp.ne.s32.totalorder %s53, %s55
      %p62 = scmp.eq.s32.totalorder %s24, 3
      %p63 = por %p61, %p62
      %p64 = scmp.ne.s32.totalorder %s55, %s56
      %p65 = scmp.eq.s32.totalorder %s24, 0
      %p66 = por %p64, %p65
      %p67 = scmp.ne.s32.totalorder %s55, %s56
      %p68 = scmp.eq.s32.totalorder %s25, 3
      %p69 = por %p67, %p68
      %p71 = scmp.ne.s32.totalorder %s56, %s70
      %p72 = scmp.eq.s32.totalorder %s25, 0
      %p73 = por %p71, %p72
      %s75 = sadd.s32 %s74, 1
      %p78 = scmp.eq.s32.totalorder %s19, 3
      %p79 = scmp.ne.s32.totalorder %s74, %s76
      %p80 = scmp.eq.s32.totalorder %s19, 0
      %p81 = por %p79, %p80
      %p82 = scmp.ne.s32.totalorder %s74, %s76
      %p83 = scmp.eq.s32.totalorder %s24, 3
      %p84 = por %p82, %p83
      %p85 = scmp.ne.s32.totalorder %s76, %s77
      %p86 = scmp.eq.s32.totalorder %s24, 0
      %p87 = por %p85, %p86
      %p88 = scmp.ne.s32.totalorder %s76, %s77
      %p89 = scmp.eq.s32.totalorder %s25, 3
      %p90 = por %p88, %p89
      %p92 = scmp.ne.s32.totalorder %s77, %s91
      %p93 = scmp.eq.s32.totalorder %s25, 0
      %p94 = por %p92, %p93
      %s96 = sadd.s32 %s95, 1
      %p99 = scmp.eq.s32.totalorder %s19, 3
      %p100 = scmp.ne.s32.totalorder %s95, %s97
      %p101 = scmp.eq.s32.totalorder %s19, 0
      %p102 = por %p100, %p101
      %p103 = scmp.ne.s32.totalorder %s95, %s97
      %p104 = scmp.eq.s32.totalorder %s24, 3
      %p105 = por %p103, %p104
      %p106 = scmp.ne.s32.totalorder %s97, %s98
      %p107 = scmp.eq.s32.totalorder %s24, 0
      %p108 = por %p106, %p107
      %p109 = scmp.ne.s32.totalorder %s97, %s98
      %p110 = scmp.eq.s32.totalorder %s25, 3
      %p111 = por %p109, %p110
      %p113 = scmp.ne.s32.totalorder %s98, %s112
      %p114 = scmp.eq.s32.totalorder %s25, 0
      %p115 = por %p113, %p114
      %s117 = sadd.s32 %s116, 1
      %p120 = scmp.eq.s32.totalorder %s19, 3
      %p121 = scmp.ne.s32.totalorder %s116, %s118
      %p122 = scmp.eq.s32.totalorder %s19, 0
      %p123 = por %p121, %p122
      %p124 = scmp.ne.s32.totalorder %s116, %s118
      %p125 = scmp.eq.s32.totalorder %s24, 3
      %p126 = por %p124, %p125
      %p127 = scmp.ne.s32.totalorder %s118, %s119
      %p128 = scmp.eq.s32.totalorder %s24, 0
      %p129 = por %p127, %p128
      %p130 = scmp.ne.s32.totalorder %s118, %s119
      %p131 = scmp.eq.s32.totalorder %s25, 3
      %p132 = por %p130, %p131
      %p134 = scmp.ne.s32.totalorder %s119, %s133
      %p135 = scmp.eq.s32.totalorder %s25, 0
      %p136 = por %p134, %p135
      %s137 = ssub.s32 %s19, %s26
      %p138 = scmp.eq.s32.totalorder %s137, 0
      %s140 = sadd.s32 %s139, 1
      %s141 = scalar_select %p138, %s139, %s140
      %p144 = pneg %p138
      %p145 = scmp.eq.s32.totalorder %s19, 3
      %p146 = por %p144, %p145
      %p147 = scmp.ne.s32.totalorder %s139, %s142
      %p148 = scmp.eq.s32.totalorder %s19, 0
      %p149 = por %p147, %p148
      %p150 = scmp.ne.s32.totalorder %s139, %s142
      %p151 = scmp.eq.s32.totalorder %s24, 3
      %p152 = por %p150, %p151
      %p153 = scmp.ne.s32.totalorder %s142, %s143
      %p154 = scmp.eq.s32.totalorder %s24, 0
      %p155 = por %p153, %p154
      %p156 = scmp.ne.s32.totalorder %s142, %s143
      %p157 = scmp.eq.s32.totalorder %s25, 3
      %p158 = por %p156, %p157
      %p160 = scmp.ne.s32.totalorder %s143, %s159
      %p161 = scmp.eq.s32.totalorder %s25, 0
      %p162 = por %p160, %p161
      %s163 = ssub.s32 %s19, %s26
      %p164 = scmp.eq.s32.totalorder %s163, 0
      %s166 = sadd.s32 %s165, 1
      %s167 = scalar_select %p164, %s165, %s166
      %p170 = pneg %p164
      %p171 = scmp.eq.s32.totalorder %s19, 3
      %p172 = por %p170, %p171
      %p173 = scmp.ne.s32.totalorder %s165, %s168
      %p174 = scmp.eq.s32.totalorder %s19, 0
      %p175 = por %p173, %p174
      %p176 = scmp.ne.s32.totalorder %s165, %s168
      %p177 = scmp.eq.s32.totalorder %s24, 3
      %p178 = por %p176, %p177
      %p179 = scmp.ne.s32.totalorder %s168, %s169
      %p180 = scmp.eq.s32.totalorder %s24, 0
      %p181 = por %p179, %p180
      %p182 = scmp.ne.s32.totalorder %s168, %s169
      %p183 = scmp.eq.s32.totalorder %s25, 3
      %p184 = por %p182, %p183
      %p186 = scmp.ne.s32.totalorder %s169, %s185
      %p187 = scmp.eq.s32.totalorder %s25, 0
      %p188 = por %p186, %p187
      %p189 = scmp.le.s32.totalorder 1, %s19
      %p190 = scmp.lt.s32.totalorder %s19, 5
      %p191 = pnand %p189, %p190
      %p192 = pneg %p191
      // Predicated region
      $region9: #{tpu_custom_call.1} parent=5 // pred_check
        _
      $region10: #{tpu_custom_call.1} parent=5 // pred_check_branch
        %194 = sbr.rel (%p191) target = $region12
      $region11: #{tpu_custom_call.1} parent=5 // pred_region
        %s195 = ssub.s32 %s19, 1
        // Predicated region
        $region13: #{tpu_custom_call.1} parent=11 // pred_check
          %p196 = pneg %p66
        $region14: #{tpu_custom_call.1} parent=11 // pred_check_branch
          %198 = sbr.rel (%p196) target = $region16
        $region15: #{tpu_custom_call.1} parent=11 // pred_region
          _
        $region16: #{tpu_custom_call.1} parent=11 // pred_fallthru
          _
        // Predicated region
        $region17: #{tpu_custom_call.1} parent=11 // pred_check
          %p199 = pneg %p87
        $region18: #{tpu_custom_call.1} parent=11 // pred_check_branch
          %201 = sbr.rel (%p199) target = $region20
        $region19: #{tpu_custom_call.1} parent=11 // pred_region
          _
        $region20: #{tpu_custom_call.1} parent=11 // pred_fallthru
          _
        // Predicated region
        $region21: #{tpu_custom_call.1} parent=11 // pred_check
          %p202 = pneg %p108
        $region22: #{tpu_custom_call.1} parent=11 // pred_check_branch
          %204 = sbr.rel (%p202) target = $region24
        $region23: #{tpu_custom_call.1} parent=11 // pred_region
          _
        $region24: #{tpu_custom_call.1} parent=11 // pred_fallthru
          _
        // Predicated region
        $region25: #{tpu_custom_call.1} parent=11 // pred_check
          %p205 = pneg %p129
        $region26: #{tpu_custom_call.1} parent=11 // pred_check_branch
          %207 = sbr.rel (%p205) target = $region28
        $region27: #{tpu_custom_call.1} parent=11 // pred_region
          _
        $region28: #{tpu_custom_call.1} parent=11 // pred_fallthru
          _
      $region12: #{tpu_custom_call.1} parent=5 // pred_fallthru
        _
      %p208 = scmp.lt.s32.totalorder %s19, 4
      // Predicated region
      $region29: #{tpu_custom_call.1} parent=5 // pred_check
        %p209 = pneg %p208
      $region30: #{tpu_custom_call.1} parent=5 // pred_check_branch
        %211 = sbr.rel (%p209) target = $region32
      $region31: #{tpu_custom_call.1} parent=5 // pred_region
        // Predicated region
        $region33: #{tpu_custom_call.1} parent=31 // pred_check
          %p212 = pneg %p39
        $region34: #{tpu_custom_call.1} parent=31 // pred_check_branch
          %214 = sbr.rel (%p212) target = $region36
        $region35: #{tpu_custom_call.1} parent=31 // pred_region
          %s215 = smul.u32 64, %s19
          %p216 = scmp.lt.s32.totalorder %s215, 255
          %s217 = scalar_select %p216, %s215, 255
          %s218 = smul.addr %s217, 8
          %s219 = scalar_lea.vmem %s0, %s218
          %s220 = smul.u32 64, %s19
        $region36: #{tpu_custom_call.1} parent=31 // pred_fallthru
          _
      $region32: #{tpu_custom_call.1} parent=5 // pred_fallthru
        _
      %p221 = scmp.le.s32.totalorder 1, %s19
      %p222 = scmp.lt.s32.totalorder %s19, 5
      %p223 = pnand %p221, %p222
      %p224 = pneg %p223
      // Predicated region
      $region37: #{tpu_custom_call.1} parent=5 // pred_check
        _
      $region38: #{tpu_custom_call.1} parent=5 // pred_check_branch
        %226 = sbr.rel (%p223) target = $region40
      $region39: #{tpu_custom_call.1} parent=5 // pred_region
        %s227 = ssub.s32 %s19, 1
        %s228 = smul.u32 64, %s24
        %p229 = scmp.lt.s32.totalorder %s228, 255
        %s230 = scalar_select %p229, %s228, 255
        %s231 = smul.addr %s230, 8
        %s232 = scalar_lea.vmem %s0, %s231
        %p233 = pneg %p45
        %p234 = pneg %p42
        %p235 = pneg %p66
        %p236 = pneg %p63
        %p237 = pneg %p87
        %p238 = pneg %p84
        %p239 = pneg %p108
        %p240 = pneg %p105
        %p241 = pneg %p129
        %p242 = pneg %p126
        %p243 = pneg %p155
        %p244 = pneg %p152
        %s245 = sand.u32 %s142, 1
        %s246 = scalar_lea.sflag [#allocation3], %s245
        %s247 = sand.u32 %s142, 1
        %s248 = smul.addr %s247, 8
        %s249 = scalar_lea.vmem [#allocation2], %s248
        %p250 = pneg %p181
        %p251 = pneg %p178
        %s252 = sand.u32 %s168, 1
        %s253 = scalar_lea.sflag [#allocation5], %s252
        %s254 = sand.u32 %s168, 1
        %s255 = smul.addr %s254, 8
        %s256 = scalar_lea.vmem [#allocation4], %s255
        %s257 = smul.u32 64, %s24
        %p258 = scmp.lt.s32.totalorder %s257, 255
        %s259 = scalar_select %p258, %s257, 255
        %s260 = smul.addr %s259, 8
        %s261 = scalar_lea.vmem %s0, %s260
        %s262 = smul.u32 64, %s24
        %v263 = vld [vmem:[%s261] sm:$0xff]
        %v264 = vld [vmem:[%s261 + $0x8] sm:$0xff]
        %v265 = vld [vmem:[%s261 + $0x10] sm:$0xff]
        %v266 = vld [vmem:[%s261 + $0x18] sm:$0xff]
        %v267 = vld [vmem:[%s261 + $0x20] sm:$0xff]
        %v268 = vld [vmem:[%s261 + $0x28] sm:$0xff]
        %v269 = vld [vmem:[%s261 + $0x30] sm:$0xff]
        %v270 = vld [vmem:[%s261 + $0x38] sm:$0xff]
        %v271 = vld [vmem:[%s261 + $0x40] sm:$0xff]
        %v272 = vld [vmem:[%s261 + $0x48] sm:$0xff]
        %v273 = vld [vmem:[%s261 + $0x50] sm:$0xff]
        %v274 = vld [vmem:[%s261 + $0x58] sm:$0xff]
        %v275 = vld [vmem:[%s261 + $0x60] sm:$0xff]
        %v276 = vld [vmem:[%s261 + $0x68] sm:$0xff]
        %v277 = vld [vmem:[%s261 + $0x70] sm:$0xff]
        %v278 = vld [vmem:[%s261 + $0x78] sm:$0xff]
        %v279 = vld [vmem:[%s261 + $0x80] sm:$0xff]
        %v280 = vld [vmem:[%s261 + $0x88] sm:$0xff]
        %v281 = vld [vmem:[%s261 + $0x90] sm:$0xff]
        %v282 = vld [vmem:[%s261 + $0x98] sm:$0xff]
        %v283 = vld [vmem:[%s261 + $0xa0] sm:$0xff]
        %v284 = vld [vmem:[%s261 + $0xa8] sm:$0xff]
        %v285 = vld [vmem:[%s261 + $0xb0] sm:$0xff]
        %v286 = vld [vmem:[%s261 + $0xb8] sm:$0xff]
        %v287 = vld [vmem:[%s261 + $0xc0] sm:$0xff]
        %v288 = vld [vmem:[%s261 + $0xc8] sm:$0xff]
        %v289 = vld [vmem:[%s261 + $0xd0] sm:$0xff]
        %v290 = vld [vmem:[%s261 + $0xd8] sm:$0xff]
        %v291 = vld [vmem:[%s261 + $0xe0] sm:$0xff]
        %v292 = vld [vmem:[%s261 + $0xe8] sm:$0xff]
        %v293 = vld [vmem:[%s261 + $0xf0] sm:$0xff]
        %v294 = vld [vmem:[%s261 + $0xf8] sm:$0xff]
        %v295 = vld [vmem:[%s261 + $0x100] sm:$0xff]
        %v296 = vld [vmem:[%s261 + $0x108] sm:$0xff]
        %v297 = vld [vmem:[%s261 + $0x110] sm:$0xff]
        %v298 = vld [vmem:[%s261 + $0x118] sm:$0xff]
        %v299 = vld [vmem:[%s261 + $0x120] sm:$0xff]
        %v300 = vld [vmem:[%s261 + $0x128] sm:$0xff]
        %v301 = vld [vmem:[%s261 + $0x130] sm:$0xff]
        %v302 = vld [vmem:[%s261 + $0x138] sm:$0xff]
        %v303 = vld [vmem:[%s261 + $0x140] sm:$0xff]
        %v304 = vld [vmem:[%s261 + $0x148] sm:$0xff]
        %v305 = vld [vmem:[%s261 + $0x150] sm:$0xff]
        %v306 = vld [vmem:[%s261 + $0x158] sm:$0xff]
        %v307 = vld [vmem:[%s261 + $0x160] sm:$0xff]
        %v308 = vld [vmem:[%s261 + $0x168] sm:$0xff]
        %v309 = vld [vmem:[%s261 + $0x170] sm:$0xff]
        %v310 = vld [vmem:[%s261 + $0x178] sm:$0xff]
        %v311 = vld [vmem:[%s261 + $0x180] sm:$0xff]
        %v312 = vld [vmem:[%s261 + $0x188] sm:$0xff]
        %v313 = vld [vmem:[%s261 + $0x190] sm:$0xff]
        %v314 = vld [vmem:[%s261 + $0x198] sm:$0xff]
        %v315 = vld [vmem:[%s261 + $0x1a0] sm:$0xff]
        %v316 = vld [vmem:[%s261 + $0x1a8] sm:$0xff]
        %v317 = vld [vmem:[%s261 + $0x1b0] sm:$0xff]
        %v318 = vld [vmem:[%s261 + $0x1b8] sm:$0xff]
        %v319 = vld [vmem:[%s261 + $0x1c0] sm:$0xff]
        %v320 = vld [vmem:[%s261 + $0x1c8] sm:$0xff]
        %v321 = vld [vmem:[%s261 + $0x1d0] sm:$0xff]
        %v322 = vld [vmem:[%s261 + $0x1d8] sm:$0xff]
        %v323 = vld [vmem:[%s261 + $0x1e0] sm:$0xff]
        %v324 = vld [vmem:[%s261 + $0x1e8] sm:$0xff]
        %v325 = vld [vmem:[%s261 + $0x1f0] sm:$0xff]
        %v326 = vld [vmem:[%s261 + $0x1f8] sm:$0xff]
        %v327 = vld [vmem:[%s1] sm:$0xff]
        %v328 = vld [vmem:[%s1 + $0x8] sm:$0xff]
        %v329 = vld [vmem:[%s1 + $0x10] sm:$0xff]
        %v330 = vld [vmem:[%s1 + $0x18] sm:$0xff]
        %v331 = vld [vmem:[%s2] sm:$0x1]
        %v333 = vperm.slane %v331, 0
        %vm335 = vcmask 261120
        %v337 = vsel %vm335, %v263, 0
        %v340 = vsel %vm335, %v264, 0
        %v343 = vsel %vm335, %v265, 0
        %v346 = vsel %vm335, %v266, 0
        %v349 = vsel %vm335, %v267, 0
        %v352 = vsel %vm335, %v268, 0
        %v355 = vsel %vm335, %v269, 0
        %v358 = vsel %vm335, %v270, 0
        %v361 = vsel %vm335, %v271, 0
        %v364 = vsel %vm335, %v272, 0
        %v367 = vsel %vm335, %v273, 0
        %v370 = vsel %vm335, %v274, 0
        %v373 = vsel %vm335, %v275, 0
        %v376 = vsel %vm335, %v276, 0
        %v379 = vsel %vm335, %v277, 0
        %v382 = vsel %vm335, %v278, 0
        %v385 = vsel %vm335, %v279, 0
        %v388 = vsel %vm335, %v280, 0
        %v391 = vsel %vm335, %v281, 0
        %v394 = vsel %vm335, %v282, 0
        %v397 = vsel %vm335, %v283, 0
        %v400 = vsel %vm335, %v284, 0
        %v403 = vsel %vm335, %v285, 0
        %v406 = vsel %vm335, %v286, 0
        %v409 = vsel %vm335, %v287, 0
        %v412 = vsel %vm335, %v288, 0
        %v415 = vsel %vm335, %v289, 0
        %v418 = vsel %vm335, %v290, 0
        %v421 = vsel %vm335, %v291, 0
        %v424 = vsel %vm335, %v292, 0
        %v427 = vsel %vm335, %v293, 0
        %v430 = vsel %vm335, %v294, 0
        %v433 = vsel %vm335, %v295, 0
        %v436 = vsel %vm335, %v296, 0
        %v439 = vsel %vm335, %v297, 0
        %v442 = vsel %vm335, %v298, 0
        %v445 = vsel %vm335, %v299, 0
        %v448 = vsel %vm335, %v300, 0
        %v451 = vsel %vm335, %v301, 0
        %v454 = vsel %vm335, %v302, 0
        %v457 = vsel %vm335, %v303, 0
        %v460 = vsel %vm335, %v304, 0
        %v463 = vsel %vm335, %v305, 0
        %v466 = vsel %vm335, %v306, 0
        %v469 = vsel %vm335, %v307, 0
        %v472 = vsel %vm335, %v308, 0
        %v475 = vsel %vm335, %v309, 0
        %v478 = vsel %vm335, %v310, 0
        %v481 = vsel %vm335, %v311, 0
        %v484 = vsel %vm335, %v312, 0
        %v487 = vsel %vm335, %v313, 0
        %v490 = vsel %vm335, %v314, 0
        %v493 = vsel %vm335, %v315, 0
        %v496 = vsel %vm335, %v316, 0
        %v499 = vsel %vm335, %v317, 0
        %v502 = vsel %vm335, %v318, 0
        %v505 = vsel %vm335, %v319, 0
        %v508 = vsel %vm335, %v320, 0
        %v511 = vsel %vm335, %v321, 0
        %v514 = vsel %vm335, %v322, 0
        %v517 = vsel %vm335, %v323, 0
        %v520 = vsel %vm335, %v324, 0
        %v523 = vsel %vm335, %v325, 0
        %v526 = vsel %vm335, %v326, 0
        %528 = vmatpush.msra.mxu0 0.0
        %529 = vmatpush.msra.mxu0 0.0
        %530 = vmatpush.msra.mxu0 0.0
        %531 = vmatpush.msra.mxu0 0.0
        %532 = vmatpush.msra.mxu0 0.0
        %533 = vmatpush.msra.mxu0 0.0
        %534 = vmatpush.msra.mxu0 0.0
        %535 = vmatpush.msra.mxu0 0.0
        %536 = vmatpush.msra.mxu0 0.0
        %537 = vmatpush.msra.mxu0 0.0
        %538 = vmatpush.msra.mxu0 0.0
        %539 = vmatpush.msra.mxu0 0.0
        %540 = vmatpush.msra.mxu0 %v330
        %541 = vmatpush.msra.mxu0 %v329
        %542 = vmatpush.msra.mxu0 %v328
        %543 = vmatpush.msra.mxu0 %v327
        %544 = vmatmul.f32.gmra.mxu0 %v337
        %v545 = vpop.f32.mrf.mxu0
        %v546 = vadd.f32 %v333, %v545
        %547 = vmatmul.f32.gmra.mxu0 %v340
        %v548 = vpop.f32.mrf.mxu0
        %v549 = vadd.f32 %v333, %v548
        %550 = vmatmul.f32.gmra.mxu0 %v343
        %v551 = vpop.f32.mrf.mxu0
        %v552 = vadd.f32 %v333, %v551
        %553 = vmatmul.f32.gmra.mxu0 %v346
        %v554 = vpop.f32.mrf.mxu0
        %v555 = vadd.f32 %v333, %v554
        %556 = vmatmul.f32.gmra.mxu0 %v349
        %v557 = vpop.f32.mrf.mxu0
        %v558 = vadd.f32 %v333, %v557
        %559 = vmatmul.f32.gmra.mxu0 %v352
        %v560 = vpop.f32.mrf.mxu0
        %v561 = vadd.f32 %v333, %v560
        %562 = vmatmul.f32.gmra.mxu0 %v355
        %v563 = vpop.f32.mrf.mxu0
        %v564 = vadd.f32 %v333, %v563
        %565 = vmatmul.f32.gmra.mxu0 %v358
        %v566 = vpop.f32.mrf.mxu0
        %v567 = vadd.f32 %v333, %v566
        %568 = vmatmul.f32.gmra.mxu0 %v361
        %v569 = vpop.f32.mrf.mxu0
        %v570 = vadd.f32 %v333, %v569
        %571 = vmatmul.f32.gmra.mxu0 %v364
        %v572 = vpop.f32.mrf.mxu0
        %v573 = vadd.f32 %v333, %v572
        %574 = vmatmul.f32.gmra.mxu0 %v367
        %v575 = vpop.f32.mrf.mxu0
        %v576 = vadd.f32 %v333, %v575
        %577 = vmatmul.f32.gmra.mxu0 %v370
        %v578 = vpop.f32.mrf.mxu0
        %v579 = vadd.f32 %v333, %v578
        %580 = vmatmul.f32.gmra.mxu0 %v373
        %v581 = vpop.f32.mrf.mxu0
        %v582 = vadd.f32 %v333, %v581
        %583 = vmatmul.f32.gmra.mxu0 %v376
        %v584 = vpop.f32.mrf.mxu0
        %v585 = vadd.f32 %v333, %v584
        %586 = vmatmul.f32.gmra.mxu0 %v379
        %v587 = vpop.f32.mrf.mxu0
        %v588 = vadd.f32 %v333, %v587
        %589 = vmatmul.f32.gmra.mxu0 %v382
        %v590 = vpop.f32.mrf.mxu0
        %v591 = vadd.f32 %v333, %v590
        %592 = vmatmul.f32.gmra.mxu0 %v385
        %v593 = vpop.f32.mrf.mxu0
        %v594 = vadd.f32 %v333, %v593
        %595 = vmatmul.f32.gmra.mxu0 %v388
        %v596 = vpop.f32.mrf.mxu0
        %v597 = vadd.f32 %v333, %v596
        %598 = vmatmul.f32.gmra.mxu0 %v391
        %v599 = vpop.f32.mrf.mxu0
        %v600 = vadd.f32 %v333, %v599
        %601 = vmatmul.f32.gmra.mxu0 %v394
        %v602 = vpop.f32.mrf.mxu0
        %v603 = vadd.f32 %v333, %v602
        %604 = vmatmul.f32.gmra.mxu0 %v397
        %v605 = vpop.f32.mrf.mxu0
        %v606 = vadd.f32 %v333, %v605
        %607 = vmatmul.f32.gmra.mxu0 %v400
        %v608 = vpop.f32.mrf.mxu0
        %v609 = vadd.f32 %v333, %v608
        %610 = vmatmul.f32.gmra.mxu0 %v403
        %v611 = vpop.f32.mrf.mxu0
        %v612 = vadd.f32 %v333, %v611
        %613 = vmatmul.f32.gmra.mxu0 %v406
        %v614 = vpop.f32.mrf.mxu0
        %v615 = vadd.f32 %v333, %v614
        %616 = vmatmul.f32.gmra.mxu0 %v409
        %v617 = vpop.f32.mrf.mxu0
        %v618 = vadd.f32 %v333, %v617
        %619 = vmatmul.f32.gmra.mxu0 %v412
        %v620 = vpop.f32.mrf.mxu0
        %v621 = vadd.f32 %v333, %v620
        %622 = vmatmul.f32.gmra.mxu0 %v415
        %v623 = vpop.f32.mrf.mxu0
        %v624 = vadd.f32 %v333, %v623
        %625 = vmatmul.f32.gmra.mxu0 %v418
        %v626 = vpop.f32.mrf.mxu0
        %v627 = vadd.f32 %v333, %v626
        %628 = vmatmul.f32.gmra.mxu0 %v421
        %v629 = vpop.f32.mrf.mxu0
        %v630 = vadd.f32 %v333, %v629
        %631 = vmatmul.f32.gmra.mxu0 %v424
        %v632 = vpop.f32.mrf.mxu0
        %v633 = vadd.f32 %v333, %v632
        %634 = vmatmul.f32.gmra.mxu0 %v427
        %v635 = vpop.f32.mrf.mxu0
        %v636 = vadd.f32 %v333, %v635
        %637 = vmatmul.f32.gmra.mxu0 %v430
        %v638 = vpop.f32.mrf.mxu0
        %v639 = vadd.f32 %v333, %v638
        %640 = vmatmul.f32.gmra.mxu0 %v433
        %v641 = vpop.f32.mrf.mxu0
        %v642 = vadd.f32 %v333, %v641
        %643 = vmatmul.f32.gmra.mxu0 %v436
        %v644 = vpop.f32.mrf.mxu0
        %v645 = vadd.f32 %v333, %v644
        %646 = vmatmul.f32.gmra.mxu0 %v439
        %v647 = vpop.f32.mrf.mxu0
        %v648 = vadd.f32 %v333, %v647
        %649 = vmatmul.f32.gmra.mxu0 %v442
        %v650 = vpop.f32.mrf.mxu0
        %v651 = vadd.f32 %v333, %v650
        %652 = vmatmul.f32.gmra.mxu0 %v445
        %v653 = vpop.f32.mrf.mxu0
        %v654 = vadd.f32 %v333, %v653
        %655 = vmatmul.f32.gmra.mxu0 %v448
        %v656 = vpop.f32.mrf.mxu0
        %v657 = vadd.f32 %v333, %v656
        %658 = vmatmul.f32.gmra.mxu0 %v451
        %v659 = vpop.f32.mrf.mxu0
        %v660 = vadd.f32 %v333, %v659
        %661 = vmatmul.f32.gmra.mxu0 %v454
        %v662 = vpop.f32.mrf.mxu0
        %v663 = vadd.f32 %v333, %v662
        %664 = vmatmul.f32.gmra.mxu0 %v457
        %v665 = vpop.f32.mrf.mxu0
        %v666 = vadd.f32 %v333, %v665
        %667 = vmatmul.f32.gmra.mxu0 %v460
        %v668 = vpop.f32.mrf.mxu0
        %v669 = vadd.f32 %v333, %v668
        %670 = vmatmul.f32.gmra.mxu0 %v463
        %v671 = vpop.f32.mrf.mxu0
        %v672 = vadd.f32 %v333, %v671
        %673 = vmatmul.f32.gmra.mxu0 %v466
        %v674 = vpop.f32.mrf.mxu0
        %v675 = vadd.f32 %v333, %v674
        %676 = vmatmul.f32.gmra.mxu0 %v469
        %v677 = vpop.f32.mrf.mxu0
        %v678 = vadd.f32 %v333, %v677
        %679 = vmatmul.f32.gmra.mxu0 %v472
        %v680 = vpop.f32.mrf.mxu0
        %v681 = vadd.f32 %v333, %v680
        %682 = vmatmul.f32.gmra.mxu0 %v475
        %v683 = vpop.f32.mrf.mxu0
        %v684 = vadd.f32 %v333, %v683
        %685 = vmatmul.f32.gmra.mxu0 %v478
        %v686 = vpop.f32.mrf.mxu0
        %v687 = vadd.f32 %v333, %v686
        %688 = vmatmul.f32.gmra.mxu0 %v481
        %v689 = vpop.f32.mrf.mxu0
        %v690 = vadd.f32 %v333, %v689
        %691 = vmatmul.f32.gmra.mxu0 %v484
        %v692 = vpop.f32.mrf.mxu0
        %v693 = vadd.f32 %v333, %v692
        %694 = vmatmul.f32.gmra.mxu0 %v487
        %v695 = vpop.f32.mrf.mxu0
        %v696 = vadd.f32 %v333, %v695
        %697 = vmatmul.f32.gmra.mxu0 %v490
        %v698 = vpop.f32.mrf.mxu0
        %v699 = vadd.f32 %v333, %v698
        %700 = vmatmul.f32.gmra.mxu0 %v493
        %v701 = vpop.f32.mrf.mxu0
        %v702 = vadd.f32 %v333, %v701
        %703 = vmatmul.f32.gmra.mxu0 %v496
        %v704 = vpop.f32.mrf.mxu0
        %v705 = vadd.f32 %v333, %v704
        %706 = vmatmul.f32.gmra.mxu0 %v499
        %v707 = vpop.f32.mrf.mxu0
        %v708 = vadd.f32 %v333, %v707
        %709 = vmatmul.f32.gmra.mxu0 %v502
        %v710 = vpop.f32.mrf.mxu0
        %v711 = vadd.f32 %v333, %v710
        %712 = vmatmul.f32.gmra.mxu0 %v505
        %v713 = vpop.f32.mrf.mxu0
        %v714 = vadd.f32 %v333, %v713
        %715 = vmatmul.f32.gmra.mxu0 %v508
        %v716 = vpop.f32.mrf.mxu0
        %v717 = vadd.f32 %v333, %v716
        %718 = vmatmul.f32.gmra.mxu0 %v511
        %v719 = vpop.f32.mrf.mxu0
        %v720 = vadd.f32 %v333, %v719
        %721 = vmatmul.f32.gmra.mxu0 %v514
        %v722 = vpop.f32.mrf.mxu0
        %v723 = vadd.f32 %v333, %v722
        %724 = vmatmul.f32.gmra.mxu0 %v517
        %v725 = vpop.f32.mrf.mxu0
        %v726 = vadd.f32 %v333, %v725
        %727 = vmatmul.f32.gmra.mxu0 %v520
        %v728 = vpop.f32.mrf.mxu0
        %v729 = vadd.f32 %v333, %v728
        %730 = vmatmul.f32.gmra.mxu0 %v523
        %v731 = vpop.f32.mrf.mxu0
        %v732 = vadd.f32 %v333, %v731
        %733 = vmatmul.f32.gmra.mxu0 %v526
        %v734 = vpop.f32.mrf.mxu0
        %v735 = vadd.f32 %v333, %v734
        %736 = vdwg.mxu0
        %v737 = vld [vmem:[%s3] sm:$0xff]
        %v738 = vld [vmem:[%s3 + $0x8] sm:$0xff]
        %v739 = vld [vmem:[%s3 + $0x10] sm:$0xff]
        %v740 = vld [vmem:[%s3 + $0x18] sm:$0xff]
        %v741 = vld [vmem:[%s3 + $0x20] sm:$0xff]
        %v742 = vld [vmem:[%s3 + $0x28] sm:$0xff]
        %v743 = vld [vmem:[%s3 + $0x30] sm:$0xff]
        %v744 = vld [vmem:[%s3 + $0x38] sm:$0xff]
        %v745 = vld [vmem:[%s3 + $0x40] sm:$0xff]
        %v746 = vld [vmem:[%s3 + $0x48] sm:$0xff]
        %v747 = vld [vmem:[%s3 + $0x50] sm:$0xff]
        %v748 = vld [vmem:[%s3 + $0x58] sm:$0xff]
        %v749 = vld [vmem:[%s3 + $0x60] sm:$0xff]
        %v750 = vld [vmem:[%s3 + $0x68] sm:$0xff]
        %v751 = vld [vmem:[%s3 + $0x70] sm:$0xff]
        %v752 = vld [vmem:[%s3 + $0x78] sm:$0xff]
        %753 = vmatpush.msra.mxu0 %v752
        %754 = vmatpush.msra.mxu0 %v751
        %755 = vmatpush.msra.mxu0 %v750
        %756 = vmatpush.msra.mxu0 %v749
        %757 = vmatpush.msra.mxu0 %v748
        %758 = vmatpush.msra.mxu0 %v747
        %759 = vmatpush.msra.mxu0 %v746
        %760 = vmatpush.msra.mxu0 %v745
        %761 = vmatpush.msra.mxu0 %v744
        %762 = vmatpush.msra.mxu0 %v743
        %763 = vmatpush.msra.mxu0 %v742
        %764 = vmatpush.msra.mxu0 %v741
        %765 = vmatpush.msra.mxu0 %v740
        %766 = vmatpush.msra.mxu0 %v739
        %767 = vmatpush.msra.mxu0 %v738
        %768 = vmatpush.msra.mxu0 %v737
        %769 = vmatmul.f32.gmra.mxu0 %v546
        %v770 = vpop.f32.mrf.mxu0
        %v771 = vadd.f32 0.0, %v770
        %772 = vmatmul.f32.gmra.mxu0 %v549
        %v773 = vpop.f32.mrf.mxu0
        %v774 = vadd.f32 0.0, %v773
        %775 = vmatmul.f32.gmra.mxu0 %v552
        %v776 = vpop.f32.mrf.mxu0
        %v777 = vadd.f32 0.0, %v776
        %778 = vmatmul.f32.gmra.mxu0 %v555
        %v779 = vpop.f32.mrf.mxu0
        %v780 = vadd.f32 0.0, %v779
        %781 = vmatmul.f32.gmra.mxu0 %v558
        %v782 = vpop.f32.mrf.mxu0
        %v783 = vadd.f32 0.0, %v782
        %784 = vmatmul.f32.gmra.mxu0 %v561
        %v785 = vpop.f32.mrf.mxu0
        %v786 = vadd.f32 0.0, %v785
        %787 = vmatmul.f32.gmra.mxu0 %v564
        %v788 = vpop.f32.mrf.mxu0
        %v789 = vadd.f32 0.0, %v788
        %790 = vmatmul.f32.gmra.mxu0 %v567
        %v791 = vpop.f32.mrf.mxu0
        %v792 = vadd.f32 0.0, %v791
        %793 = vmatmul.f32.gmra.mxu0 %v570
        %v794 = vpop.f32.mrf.mxu0
        %v795 = vadd.f32 0.0, %v794
        %796 = vmatmul.f32.gmra.mxu0 %v573
        %v797 = vpop.f32.mrf.mxu0
        %v798 = vadd.f32 0.0, %v797
        %799 = vmatmul.f32.gmra.mxu0 %v576
        %v800 = vpop.f32.mrf.mxu0
        %v801 = vadd.f32 0.0, %v800
        %802 = vmatmul.f32.gmra.mxu0 %v579
        %v803 = vpop.f32.mrf.mxu0
        %v804 = vadd.f32 0.0, %v803
        %805 = vmatmul.f32.gmra.mxu0 %v582
        %v806 = vpop.f32.mrf.mxu0
        %v807 = vadd.f32 0.0, %v806
        %808 = vmatmul.f32.gmra.mxu0 %v585
        %v809 = vpop.f32.mrf.mxu0
        %v810 = vadd.f32 0.0, %v809
        %811 = vmatmul.f32.gmra.mxu0 %v588
        %v812 = vpop.f32.mrf.mxu0
        %v813 = vadd.f32 0.0, %v812
        %814 = vmatmul.f32.gmra.mxu0 %v591
        %v815 = vpop.f32.mrf.mxu0
        %v816 = vadd.f32 0.0, %v815
        %817 = vmatmul.f32.gmra.mxu0 %v594
        %v818 = vpop.f32.mrf.mxu0
        %v819 = vadd.f32 0.0, %v818
        %820 = vmatmul.f32.gmra.mxu0 %v597
        %v821 = vpop.f32.mrf.mxu0
        %v822 = vadd.f32 0.0, %v821
        %823 = vmatmul.f32.gmra.mxu0 %v600
        %v824 = vpop.f32.mrf.mxu0
        %v825 = vadd.f32 0.0, %v824
        %826 = vmatmul.f32.gmra.mxu0 %v603
        %v827 = vpop.f32.mrf.mxu0
        %v828 = vadd.f32 0.0, %v827
        %829 = vmatmul.f32.gmra.mxu0 %v606
        %v830 = vpop.f32.mrf.mxu0
        %v831 = vadd.f32 0.0, %v830
        %832 = vmatmul.f32.gmra.mxu0 %v609
        %v833 = vpop.f32.mrf.mxu0
        %v834 = vadd.f32 0.0, %v833
        %835 = vmatmul.f32.gmra.mxu0 %v612
        %v836 = vpop.f32.mrf.mxu0
        %v837 = vadd.f32 0.0, %v836
        %838 = vmatmul.f32.gmra.mxu0 %v615
        %v839 = vpop.f32.mrf.mxu0
        %v840 = vadd.f32 0.0, %v839
        %841 = vmatmul.f32.gmra.mxu0 %v618
        %v842 = vpop.f32.mrf.mxu0
        %v843 = vadd.f32 0.0, %v842
        %844 = vmatmul.f32.gmra.mxu0 %v621
        %v845 = vpop.f32.mrf.mxu0
        %v846 = vadd.f32 0.0, %v845
        %847 = vmatmul.f32.gmra.mxu0 %v624
        %v848 = vpop.f32.mrf.mxu0
        %v849 = vadd.f32 0.0, %v848
        %850 = vmatmul.f32.gmra.mxu0 %v627
        %v851 = vpop.f32.mrf.mxu0
        %v852 = vadd.f32 0.0, %v851
        %853 = vmatmul.f32.gmra.mxu0 %v630
        %v854 = vpop.f32.mrf.mxu0
        %v855 = vadd.f32 0.0, %v854
        %856 = vmatmul.f32.gmra.mxu0 %v633
        %v857 = vpop.f32.mrf.mxu0
        %v858 = vadd.f32 0.0, %v857
        %859 = vmatmul.f32.gmra.mxu0 %v636
        %v860 = vpop.f32.mrf.mxu0
        %v861 = vadd.f32 0.0, %v860
        %862 = vmatmul.f32.gmra.mxu0 %v639
        %v863 = vpop.f32.mrf.mxu0
        %v864 = vadd.f32 0.0, %v863
        %865 = vmatmul.f32.gmra.mxu0 %v642
        %v866 = vpop.f32.mrf.mxu0
        %v867 = vadd.f32 0.0, %v866
        %868 = vmatmul.f32.gmra.mxu0 %v645
        %v869 = vpop.f32.mrf.mxu0
        %v870 = vadd.f32 0.0, %v869
        %871 = vmatmul.f32.gmra.mxu0 %v648
        %v872 = vpop.f32.mrf.mxu0
        %v873 = vadd.f32 0.0, %v872
        %874 = vmatmul.f32.gmra.mxu0 %v651
        %v875 = vpop.f32.mrf.mxu0
        %v876 = vadd.f32 0.0, %v875
        %877 = vmatmul.f32.gmra.mxu0 %v654
        %v878 = vpop.f32.mrf.mxu0
        %v879 = vadd.f32 0.0, %v878
        %880 = vmatmul.f32.gmra.mxu0 %v657
        %v881 = vpop.f32.mrf.mxu0
        %v882 = vadd.f32 0.0, %v881
        %883 = vmatmul.f32.gmra.mxu0 %v660
        %v884 = vpop.f32.mrf.mxu0
        %v885 = vadd.f32 0.0, %v884
        %886 = vmatmul.f32.gmra.mxu0 %v663
        %v887 = vpop.f32.mrf.mxu0
        %v888 = vadd.f32 0.0, %v887
        %889 = vmatmul.f32.gmra.mxu0 %v666
        %v890 = vpop.f32.mrf.mxu0
        %v891 = vadd.f32 0.0, %v890
        %892 = vmatmul.f32.gmra.mxu0 %v669
        %v893 = vpop.f32.mrf.mxu0
        %v894 = vadd.f32 0.0, %v893
        %895 = vmatmul.f32.gmra.mxu0 %v672
        %v896 = vpop.f32.mrf.mxu0
        %v897 = vadd.f32 0.0, %v896
        %898 = vmatmul.f32.gmra.mxu0 %v675
        %v899 = vpop.f32.mrf.mxu0
        %v900 = vadd.f32 0.0, %v899
        %901 = vmatmul.f32.gmra.mxu0 %v678
        %v902 = vpop.f32.mrf.mxu0
        %v903 = vadd.f32 0.0, %v902
        %904 = vmatmul.f32.gmra.mxu0 %v681
        %v905 = vpop.f32.mrf.mxu0
        %v906 = vadd.f32 0.0, %v905
        %907 = vmatmul.f32.gmra.mxu0 %v684
        %v908 = vpop.f32.mrf.mxu0
        %v909 = vadd.f32 0.0, %v908
        %910 = vmatmul.f32.gmra.mxu0 %v687
        %v911 = vpop.f32.mrf.mxu0
        %v912 = vadd.f32 0.0, %v911
        %913 = vmatmul.f32.gmra.mxu0 %v690
        %v914 = vpop.f32.mrf.mxu0
        %v915 = vadd.f32 0.0, %v914
        %916 = vmatmul.f32.gmra.mxu0 %v693
        %v917 = vpop.f32.mrf.mxu0
        %v918 = vadd.f32 0.0, %v917
        %919 = vmatmul.f32.gmra.mxu0 %v696
        %v920 = vpop.f32.mrf.mxu0
        %v921 = vadd.f32 0.0, %v920
        %922 = vmatmul.f32.gmra.mxu0 %v699
        %v923 = vpop.f32.mrf.mxu0
        %v924 = vadd.f32 0.0, %v923
        %925 = vmatmul.f32.gmra.mxu0 %v702
        %v926 = vpop.f32.mrf.mxu0
        %v927 = vadd.f32 0.0, %v926
        %928 = vmatmul.f32.gmra.mxu0 %v705
        %v929 = vpop.f32.mrf.mxu0
        %v930 = vadd.f32 0.0, %v929
        %931 = vmatmul.f32.gmra.mxu0 %v708
        %v932 = vpop.f32.mrf.mxu0
        %v933 = vadd.f32 0.0, %v932
        %934 = vmatmul.f32.gmra.mxu0 %v711
        %v935 = vpop.f32.mrf.mxu0
        %v936 = vadd.f32 0.0, %v935
        %937 = vmatmul.f32.gmra.mxu0 %v714
        %v938 = vpop.f32.mrf.mxu0
        %v939 = vadd.f32 0.0, %v938
        %940 = vmatmul.f32.gmra.mxu0 %v717
        %v941 = vpop.f32.mrf.mxu0
        %v942 = vadd.f32 0.0, %v941
        %943 = vmatmul.f32.gmra.mxu0 %v720
        %v944 = vpop.f32.mrf.mxu0
        %v945 = vadd.f32 0.0, %v944
        %946 = vmatmul.f32.gmra.mxu0 %v723
        %v947 = vpop.f32.mrf.mxu0
        %v948 = vadd.f32 0.0, %v947
        %949 = vmatmul.f32.gmra.mxu0 %v726
        %v950 = vpop.f32.mrf.mxu0
        %v951 = vadd.f32 0.0, %v950
        %952 = vmatmul.f32.gmra.mxu0 %v729
        %v953 = vpop.f32.mrf.mxu0
        %v954 = vadd.f32 0.0, %v953
        %955 = vmatmul.f32.gmra.mxu0 %v732
        %v956 = vpop.f32.mrf.mxu0
        %v957 = vadd.f32 0.0, %v956
        %958 = vmatmul.f32.gmra.mxu0 %v735
        %v959 = vpop.f32.mrf.mxu0
        %v960 = vadd.f32 0.0, %v959
        %961 = vdwg.mxu0
        %v962 = vmul.f32 %v546, %v546
        %v963 = vmul.f32 %v549, %v549
        %v964 = vmul.f32 %v552, %v552
        %v965 = vmul.f32 %v555, %v555
        %v966 = vmul.f32 %v558, %v558
        %v967 = vmul.f32 %v561, %v561
        %v968 = vmul.f32 %v564, %v564
        %v969 = vmul.f32 %v567, %v567
        %v970 = vmul.f32 %v570, %v570
        %v971 = vmul.f32 %v573, %v573
        %v972 = vmul.f32 %v576, %v576
        %v973 = vmul.f32 %v579, %v579
        %v974 = vmul.f32 %v582, %v582
        %v975 = vmul.f32 %v585, %v585
        %v976 = vmul.f32 %v588, %v588
        %v977 = vmul.f32 %v591, %v591
        %v978 = vmul.f32 %v594, %v594
        %v979 = vmul.f32 %v597, %v597
        %v980 = vmul.f32 %v600, %v600
        %v981 = vmul.f32 %v603, %v603
        %v982 = vmul.f32 %v606, %v606
        %v983 = vmul.f32 %v609, %v609
        %v984 = vmul.f32 %v612, %v612
        %v985 = vmul.f32 %v615, %v615
        %v986 = vmul.f32 %v618, %v618
        %v987 = vmul.f32 %v621, %v621
        %v988 = vmul.f32 %v624, %v624
        %v989 = vmul.f32 %v627, %v627
        %v990 = vmul.f32 %v630, %v630
        %v991 = vmul.f32 %v633, %v633
        %v992 = vmul.f32 %v636, %v636
        %v993 = vmul.f32 %v639, %v639
        %v994 = vmul.f32 %v642, %v642
        %v995 = vmul.f32 %v645, %v645
        %v996 = vmul.f32 %v648, %v648
        %v997 = vmul.f32 %v651, %v651
        %v998 = vmul.f32 %v654, %v654
        %v999 = vmul.f32 %v657, %v657
        %v1000 = vmul.f32 %v660, %v660
        %v1001 = vmul.f32 %v663, %v663
        %v1002 = vmul.f32 %v666, %v666
        %v1003 = vmul.f32 %v669, %v669
        %v1004 = vmul.f32 %v672, %v672
        %v1005 = vmul.f32 %v675, %v675
        %v1006 = vmul.f32 %v678, %v678
        %v1007 = vmul.f32 %v681, %v681
        %v1008 = vmul.f32 %v684, %v684
        %v1009 = vmul.f32 %v687, %v687
        %v1010 = vmul.f32 %v690, %v690
        %v1011 = vmul.f32 %v693, %v693
        %v1012 = vmul.f32 %v696, %v696
        %v1013 = vmul.f32 %v699, %v699
        %v1014 = vmul.f32 %v702, %v702
        %v1015 = vmul.f32 %v705, %v705
        %v1016 = vmul.f32 %v708, %v708
        %v1017 = vmul.f32 %v711, %v711
        %v1018 = vmul.f32 %v714, %v714
        %v1019 = vmul.f32 %v717, %v717
        %v1020 = vmul.f32 %v720, %v720
        %v1021 = vmul.f32 %v723, %v723
        %v1022 = vmul.f32 %v726, %v726
        %v1023 = vmul.f32 %v729, %v729
        %v1024 = vmul.f32 %v732, %v732
        %v1025 = vmul.f32 %v735, %v735
        %1026 = vadd.xlane.f32.xlu0 %v962
        %v1027 = vpop.xlane.xlu0 %1026
        %1028 = vadd.xlane.f32.xlu0 %v963
        %v1029 = vpop.xlane.xlu0 %1028
        %1030 = vadd.xlane.f32.xlu0 %v964
        %v1031 = vpop.xlane.xlu0 %1030
        %1032 = vadd.xlane.f32.xlu0 %v965
        %v1033 = vpop.xlane.xlu0 %1032
        %1034 = vadd.xlane.f32.xlu0 %v966
        %v1035 = vpop.xlane.xlu0 %1034
        %1036 = vadd.xlane.f32.xlu0 %v967
        %v1037 = vpop.xlane.xlu0 %1036
        %1038 = vadd.xlane.f32.xlu0 %v968
        %v1039 = vpop.xlane.xlu0 %1038
        %1040 = vadd.xlane.f32.xlu0 %v969
        %v1041 = vpop.xlane.xlu0 %1040
        %1042 = vadd.xlane.f32.xlu0 %v970
        %v1043 = vpop.xlane.xlu0 %1042
        %1044 = vadd.xlane.f32.xlu0 %v971
        %v1045 = vpop.xlane.xlu0 %1044
        %1046 = vadd.xlane.f32.xlu0 %v972
        %v1047 = vpop.xlane.xlu0 %1046
        %1048 = vadd.xlane.f32.xlu0 %v973
        %v1049 = vpop.xlane.xlu0 %1048
        %1050 = vadd.xlane.f32.xlu0 %v974
        %v1051 = vpop.xlane.xlu0 %1050
        %1052 = vadd.xlane.f32.xlu0 %v975
        %v1053 = vpop.xlane.xlu0 %1052
        %1054 = vadd.xlane.f32.xlu0 %v976
        %v1055 = vpop.xlane.xlu0 %1054
        %1056 = vadd.xlane.f32.xlu0 %v977
        %v1057 = vpop.xlane.xlu0 %1056
        %1058 = vadd.xlane.f32.xlu0 %v978
        %v1059 = vpop.xlane.xlu0 %1058
        %1060 = vadd.xlane.f32.xlu0 %v979
        %v1061 = vpop.xlane.xlu0 %1060
        %1062 = vadd.xlane.f32.xlu0 %v980
        %v1063 = vpop.xlane.xlu0 %1062
        %1064 = vadd.xlane.f32.xlu0 %v981
        %v1065 = vpop.xlane.xlu0 %1064
        %1066 = vadd.xlane.f32.xlu0 %v982
        %v1067 = vpop.xlane.xlu0 %1066
        %1068 = vadd.xlane.f32.xlu0 %v983
        %v1069 = vpop.xlane.xlu0 %1068
        %1070 = vadd.xlane.f32.xlu0 %v984
        %v1071 = vpop.xlane.xlu0 %1070
        %1072 = vadd.xlane.f32.xlu0 %v985
        %v1073 = vpop.xlane.xlu0 %1072
        %1074 = vadd.xlane.f32.xlu0 %v986
        %v1075 = vpop.xlane.xlu0 %1074
        %1076 = vadd.xlane.f32.xlu0 %v987
        %v1077 = vpop.xlane.xlu0 %1076
        %1078 = vadd.xlane.f32.xlu0 %v988
        %v1079 = vpop.xlane.xlu0 %1078
        %1080 = vadd.xlane.f32.xlu0 %v989
        %v1081 = vpop.xlane.xlu0 %1080
        %1082 = vadd.xlane.f32.xlu0 %v990
        %v1083 = vpop.xlane.xlu0 %1082
        %1084 = vadd.xlane.f32.xlu0 %v991
        %v1085 = vpop.xlane.xlu0 %1084
        %1086 = vadd.xlane.f32.xlu0 %v992
        %v1087 = vpop.xlane.xlu0 %1086
        %1088 = vadd.xlane.f32.xlu0 %v993
        %v1089 = vpop.xlane.xlu0 %1088
        %1090 = vadd.xlane.f32.xlu0 %v994
        %v1091 = vpop.xlane.xlu0 %1090
        %1092 = vadd.xlane.f32.xlu0 %v995
        %v1093 = vpop.xlane.xlu0 %1092
        %1094 = vadd.xlane.f32.xlu0 %v996
        %v1095 = vpop.xlane.xlu0 %1094
        %1096 = vadd.xlane.f32.xlu0 %v997
        %v1097 = vpop.xlane.xlu0 %1096
        %1098 = vadd.xlane.f32.xlu0 %v998
        %v1099 = vpop.xlane.xlu0 %1098
        %1100 = vadd.xlane.f32.xlu0 %v999
        %v1101 = vpop.xlane.xlu0 %1100
        %1102 = vadd.xlane.f32.xlu0 %v1000
        %v1103 = vpop.xlane.xlu0 %1102
        %1104 = vadd.xlane.f32.xlu0 %v1001
        %v1105 = vpop.xlane.xlu0 %1104
        %1106 = vadd.xlane.f32.xlu0 %v1002
        %v1107 = vpop.xlane.xlu0 %1106
        %1108 = vadd.xlane.f32.xlu0 %v1003
        %v1109 = vpop.xlane.xlu0 %1108
        %1110 = vadd.xlane.f32.xlu0 %v1004
        %v1111 = vpop.xlane.xlu0 %1110
        %1112 = vadd.xlane.f32.xlu0 %v1005
        %v1113 = vpop.xlane.xlu0 %1112
        %1114 = vadd.xlane.f32.xlu0 %v1006
        %v1115 = vpop.xlane.xlu0 %1114
        %1116 = vadd.xlane.f32.xlu0 %v1007
        %v1117 = vpop.xlane.xlu0 %1116
        %1118 = vadd.xlane.f32.xlu0 %v1008
        %v1119 = vpop.xlane.xlu0 %1118
        %1120 = vadd.xlane.f32.xlu0 %v1009
        %v1121 = vpop.xlane.xlu0 %1120
        %1122 = vadd.xlane.f32.xlu0 %v1010
        %v1123 = vpop.xlane.xlu0 %1122
        %1124 = vadd.xlane.f32.xlu0 %v1011
        %v1125 = vpop.xlane.xlu0 %1124
        %1126 = vadd.xlane.f32.xlu0 %v1012
        %v1127 = vpop.xlane.xlu0 %1126
        %1128 = vadd.xlane.f32.xlu0 %v1013
        %v1129 = vpop.xlane.xlu0 %1128
        %1130 = vadd.xlane.f32.xlu0 %v1014
        %v1131 = vpop.xlane.xlu0 %1130
        %1132 = vadd.xlane.f32.xlu0 %v1015
        %v1133 = vpop.xlane.xlu0 %1132
        %1134 = vadd.xlane.f32.xlu0 %v1016
        %v1135 = vpop.xlane.xlu0 %1134
        %1136 = vadd.xlane.f32.xlu0 %v1017
        %v1137 = vpop.xlane.xlu0 %1136
        %1138 = vadd.xlane.f32.xlu0 %v1018
        %v1139 = vpop.xlane.xlu0 %1138
        %1140 = vadd.xlane.f32.xlu0 %v1019
        %v1141 = vpop.xlane.xlu0 %1140
        %1142 = vadd.xlane.f32.xlu0 %v1020
        %v1143 = vpop.xlane.xlu0 %1142
        %1144 = vadd.xlane.f32.xlu0 %v1021
        %v1145 = vpop.xlane.xlu0 %1144
        %1146 = vadd.xlane.f32.xlu0 %v1022
        %v1147 = vpop.xlane.xlu0 %1146
        %1148 = vadd.xlane.f32.xlu0 %v1023
        %v1149 = vpop.xlane.xlu0 %1148
        %1150 = vadd.xlane.f32.xlu0 %v1024
        %v1151 = vpop.xlane.xlu0 %1150
        %1152 = vadd.xlane.f32.xlu0 %v1025
        %v1153 = vpop.xlane.xlu0 %1152
        %v1154 = vmax.f32 %v1027, 1e-24
        %v1155 = vmax.f32 %v1029, 1e-24
        %v1156 = vmax.f32 %v1031, 1e-24
        %v1157 = vmax.f32 %v1033, 1e-24
        %v1158 = vmax.f32 %v1035, 1e-24
        %v1159 = vmax.f32 %v1037, 1e-24
        %v1160 = vmax.f32 %v1039, 1e-24
        %v1161 = vmax.f32 %v1041, 1e-24
        %v1162 = vmax.f32 %v1043, 1e-24
        %v1163 = vmax.f32 %v1045, 1e-24
        %v1164 = vmax.f32 %v1047, 1e-24
        %v1165 = vmax.f32 %v1049, 1e-24
        %v1166 = vmax.f32 %v1051, 1e-24
        %v1167 = vmax.f32 %v1053, 1e-24
        %v1168 = vmax.f32 %v1055, 1e-24
        %v1169 = vmax.f32 %v1057, 1e-24
        %v1170 = vmax.f32 %v1059, 1e-24
        %v1171 = vmax.f32 %v1061, 1e-24
        %v1172 = vmax.f32 %v1063, 1e-24
        %v1173 = vmax.f32 %v1065, 1e-24
        %v1174 = vmax.f32 %v1067, 1e-24
        %v1175 = vmax.f32 %v1069, 1e-24
        %v1176 = vmax.f32 %v1071, 1e-24
        %v1177 = vmax.f32 %v1073, 1e-24
        %v1178 = vmax.f32 %v1075, 1e-24
        %v1179 = vmax.f32 %v1077, 1e-24
        %v1180 = vmax.f32 %v1079, 1e-24
        %v1181 = vmax.f32 %v1081, 1e-24
        %v1182 = vmax.f32 %v1083, 1e-24
        %v1183 = vmax.f32 %v1085, 1e-24
        %v1184 = vmax.f32 %v1087, 1e-24
        %v1185 = vmax.f32 %v1089, 1e-24
        %v1186 = vmax.f32 %v1091, 1e-24
        %v1187 = vmax.f32 %v1093, 1e-24
        %v1188 = vmax.f32 %v1095, 1e-24
        %v1189 = vmax.f32 %v1097, 1e-24
        %v1190 = vmax.f32 %v1099, 1e-24
        %v1191 = vmax.f32 %v1101, 1e-24
        %v1192 = vmax.f32 %v1103, 1e-24
        %v1193 = vmax.f32 %v1105, 1e-24
        %v1194 = vmax.f32 %v1107, 1e-24
        %v1195 = vmax.f32 %v1109, 1e-24
        %v1196 = vmax.f32 %v1111, 1e-24
        %v1197 = vmax.f32 %v1113, 1e-24
        %v1198 = vmax.f32 %v1115, 1e-24
        %v1199 = vmax.f32 %v1117, 1e-24
        %v1200 = vmax.f32 %v1119, 1e-24
        %v1201 = vmax.f32 %v1121, 1e-24
        %v1202 = vmax.f32 %v1123, 1e-24
        %v1203 = vmax.f32 %v1125, 1e-24
        %v1204 = vmax.f32 %v1127, 1e-24
        %v1205 = vmax.f32 %v1129, 1e-24
        %v1206 = vmax.f32 %v1131, 1e-24
        %v1207 = vmax.f32 %v1133, 1e-24
        %v1208 = vmax.f32 %v1135, 1e-24
        %v1209 = vmax.f32 %v1137, 1e-24
        %v1210 = vmax.f32 %v1139, 1e-24
        %v1211 = vmax.f32 %v1141, 1e-24
        %v1212 = vmax.f32 %v1143, 1e-24
        %v1213 = vmax.f32 %v1145, 1e-24
        %v1214 = vmax.f32 %v1147, 1e-24
        %v1215 = vmax.f32 %v1149, 1e-24
        %v1216 = vmax.f32 %v1151, 1e-24
        %v1217 = vmax.f32 %v1153, 1e-24
        %v1218 = vrsqrt.pop %v1154
        %v1219 = vmul.f32 %v1218, %v1154
        %v1220 = vmul.f32 %v1219, %v1218
        %v1221 = vmul.f32 0.5, %v1220
        %v1222 = vsub.f32 1.5, %v1221
        %v1223 = vmul.f32 %v1218, %v1222
        %vm1224 = vweird.f32 %v1154
        %vm1225 = vweird.f32 %v1218
        %vm1226 = vmor %vm1224, %vm1225
        %v1227 = vsel %vm1226, %v1218, %v1223
        %v1228 = vrsqrt.pop %v1155
        %v1229 = vmul.f32 %v1228, %v1155
        %v1230 = vmul.f32 %v1229, %v1228
        %v1231 = vmul.f32 0.5, %v1230
        %v1232 = vsub.f32 1.5, %v1231
        %v1233 = vmul.f32 %v1228, %v1232
        %vm1234 = vweird.f32 %v1155
        %vm1235 = vweird.f32 %v1228
        %vm1236 = vmor %vm1234, %vm1235
        %v1237 = vsel %vm1236, %v1228, %v1233
        %v1238 = vrsqrt.pop %v1156
        %v1239 = vmul.f32 %v1238, %v1156
        %v1240 = vmul.f32 %v1239, %v1238
        %v1241 = vmul.f32 0.5, %v1240
        %v1242 = vsub.f32 1.5, %v1241
        %v1243 = vmul.f32 %v1238, %v1242
        %vm1244 = vweird.f32 %v1156
        %vm1245 = vweird.f32 %v1238
        %vm1246 = vmor %vm1244, %vm1245
        %v1247 = vsel %vm1246, %v1238, %v1243
        %v1248 = vrsqrt.pop %v1157
        %v1249 = vmul.f32 %v1248, %v1157
        %v1250 = vmul.f32 %v1249, %v1248
        %v1251 = vmul.f32 0.5, %v1250
        %v1252 = vsub.f32 1.5, %v1251
        %v1253 = vmul.f32 %v1248, %v1252
        %vm1254 = vweird.f32 %v1157
        %vm1255 = vweird.f32 %v1248
        %vm1256 = vmor %vm1254, %vm1255
        %v1257 = vsel %vm1256, %v1248, %v1253
        %v1258 = vrsqrt.pop %v1158
        %v1259 = vmul.f32 %v1258, %v1158
        %v1260 = vmul.f32 %v1259, %v1258
        %v1261 = vmul.f32 0.5, %v1260
        %v1262 = vsub.f32 1.5, %v1261
        %v1263 = vmul.f32 %v1258, %v1262
        %vm1264 = vweird.f32 %v1158
        %vm1265 = vweird.f32 %v1258
        %vm1266 = vmor %vm1264, %vm1265
        %v1267 = vsel %vm1266, %v1258, %v1263
        %v1268 = vrsqrt.pop %v1159
        %v1269 = vmul.f32 %v1268, %v1159
        %v1270 = vmul.f32 %v1269, %v1268
        %v1271 = vmul.f32 0.5, %v1270
        %v1272 = vsub.f32 1.5, %v1271
        %v1273 = vmul.f32 %v1268, %v1272
        %vm1274 = vweird.f32 %v1159
        %vm1275 = vweird.f32 %v1268
        %vm1276 = vmor %vm1274, %vm1275
        %v1277 = vsel %vm1276, %v1268, %v1273
        %v1278 = vrsqrt.pop %v1160
        %v1279 = vmul.f32 %v1278, %v1160
        %v1280 = vmul.f32 %v1279, %v1278
        %v1281 = vmul.f32 0.5, %v1280
        %v1282 = vsub.f32 1.5, %v1281
        %v1283 = vmul.f32 %v1278, %v1282
        %vm1284 = vweird.f32 %v1160
        %vm1285 = vweird.f32 %v1278
        %vm1286 = vmor %vm1284, %vm1285
        %v1287 = vsel %vm1286, %v1278, %v1283
        %v1288 = vrsqrt.pop %v1161
        %v1289 = vmul.f32 %v1288, %v1161
        %v1290 = vmul.f32 %v1289, %v1288
        %v1291 = vmul.f32 0.5, %v1290
        %v1292 = vsub.f32 1.5, %v1291
        %v1293 = vmul.f32 %v1288, %v1292
        %vm1294 = vweird.f32 %v1161
        %vm1295 = vweird.f32 %v1288
        %vm1296 = vmor %vm1294, %vm1295
        %v1297 = vsel %vm1296, %v1288, %v1293
        %v1298 = vrsqrt.pop %v1162
        %v1299 = vmul.f32 %v1298, %v1162
        %v1300 = vmul.f32 %v1299, %v1298
        %v1301 = vmul.f32 0.5, %v1300
        %v1302 = vsub.f32 1.5, %v1301
        %v1303 = vmul.f32 %v1298, %v1302
        %vm1304 = vweird.f32 %v1162
        %vm1305 = vweird.f32 %v1298
        %vm1306 = vmor %vm1304, %vm1305
        %v1307 = vsel %vm1306, %v1298, %v1303
        %v1308 = vrsqrt.pop %v1163
        %v1309 = vmul.f32 %v1308, %v1163
        %v1310 = vmul.f32 %v1309, %v1308
        %v1311 = vmul.f32 0.5, %v1310
        %v1312 = vsub.f32 1.5, %v1311
        %v1313 = vmul.f32 %v1308, %v1312
        %vm1314 = vweird.f32 %v1163
        %vm1315 = vweird.f32 %v1308
        %vm1316 = vmor %vm1314, %vm1315
        %v1317 = vsel %vm1316, %v1308, %v1313
        %v1318 = vrsqrt.pop %v1164
        %v1319 = vmul.f32 %v1318, %v1164
        %v1320 = vmul.f32 %v1319, %v1318
        %v1321 = vmul.f32 0.5, %v1320
        %v1322 = vsub.f32 1.5, %v1321
        %v1323 = vmul.f32 %v1318, %v1322
        %vm1324 = vweird.f32 %v1164
        %vm1325 = vweird.f32 %v1318
        %vm1326 = vmor %vm1324, %vm1325
        %v1327 = vsel %vm1326, %v1318, %v1323
        %v1328 = vrsqrt.pop %v1165
        %v1329 = vmul.f32 %v1328, %v1165
        %v1330 = vmul.f32 %v1329, %v1328
        %v1331 = vmul.f32 0.5, %v1330
        %v1332 = vsub.f32 1.5, %v1331
        %v1333 = vmul.f32 %v1328, %v1332
        %vm1334 = vweird.f32 %v1165
        %vm1335 = vweird.f32 %v1328
        %vm1336 = vmor %vm1334, %vm1335
        %v1337 = vsel %vm1336, %v1328, %v1333
        %v1338 = vrsqrt.pop %v1166
        %v1339 = vmul.f32 %v1338, %v1166
        %v1340 = vmul.f32 %v1339, %v1338
        %v1341 = vmul.f32 0.5, %v1340
        %v1342 = vsub.f32 1.5, %v1341
        %v1343 = vmul.f32 %v1338, %v1342
        %vm1344 = vweird.f32 %v1166
        %vm1345 = vweird.f32 %v1338
        %vm1346 = vmor %vm1344, %vm1345
        %v1347 = vsel %vm1346, %v1338, %v1343
        %v1348 = vrsqrt.pop %v1167
        %v1349 = vmul.f32 %v1348, %v1167
        %v1350 = vmul.f32 %v1349, %v1348
        %v1351 = vmul.f32 0.5, %v1350
        %v1352 = vsub.f32 1.5, %v1351
        %v1353 = vmul.f32 %v1348, %v1352
        %vm1354 = vweird.f32 %v1167
        %vm1355 = vweird.f32 %v1348
        %vm1356 = vmor %vm1354, %vm1355
        %v1357 = vsel %vm1356, %v1348, %v1353
        %v1358 = vrsqrt.pop %v1168
        %v1359 = vmul.f32 %v1358, %v1168
        %v1360 = vmul.f32 %v1359, %v1358
        %v1361 = vmul.f32 0.5, %v1360
        %v1362 = vsub.f32 1.5, %v1361
        %v1363 = vmul.f32 %v1358, %v1362
        %vm1364 = vweird.f32 %v1168
        %vm1365 = vweird.f32 %v1358
        %vm1366 = vmor %vm1364, %vm1365
        %v1367 = vsel %vm1366, %v1358, %v1363
        %v1368 = vrsqrt.pop %v1169
        %v1369 = vmul.f32 %v1368, %v1169
        %v1370 = vmul.f32 %v1369, %v1368
        %v1371 = vmul.f32 0.5, %v1370
        %v1372 = vsub.f32 1.5, %v1371
        %v1373 = vmul.f32 %v1368, %v1372
        %vm1374 = vweird.f32 %v1169
        %vm1375 = vweird.f32 %v1368
        %vm1376 = vmor %vm1374, %vm1375
        %v1377 = vsel %vm1376, %v1368, %v1373
        %v1378 = vrsqrt.pop %v1170
        %v1379 = vmul.f32 %v1378, %v1170
        %v1380 = vmul.f32 %v1379, %v1378
        %v1381 = vmul.f32 0.5, %v1380
        %v1382 = vsub.f32 1.5, %v1381
        %v1383 = vmul.f32 %v1378, %v1382
        %vm1384 = vweird.f32 %v1170
        %vm1385 = vweird.f32 %v1378
        %vm1386 = vmor %vm1384, %vm1385
        %v1387 = vsel %vm1386, %v1378, %v1383
        %v1388 = vrsqrt.pop %v1171
        %v1389 = vmul.f32 %v1388, %v1171
        %v1390 = vmul.f32 %v1389, %v1388
        %v1391 = vmul.f32 0.5, %v1390
        %v1392 = vsub.f32 1.5, %v1391
        %v1393 = vmul.f32 %v1388, %v1392
        %vm1394 = vweird.f32 %v1171
        %vm1395 = vweird.f32 %v1388
        %vm1396 = vmor %vm1394, %vm1395
        %v1397 = vsel %vm1396, %v1388, %v1393
        %v1398 = vrsqrt.pop %v1172
        %v1399 = vmul.f32 %v1398, %v1172
        %v1400 = vmul.f32 %v1399, %v1398
        %v1401 = vmul.f32 0.5, %v1400
        %v1402 = vsub.f32 1.5, %v1401
        %v1403 = vmul.f32 %v1398, %v1402
        %vm1404 = vweird.f32 %v1172
        %vm1405 = vweird.f32 %v1398
        %vm1406 = vmor %vm1404, %vm1405
        %v1407 = vsel %vm1406, %v1398, %v1403
        %v1408 = vrsqrt.pop %v1173
        %v1409 = vmul.f32 %v1408, %v1173
        %v1410 = vmul.f32 %v1409, %v1408
        %v1411 = vmul.f32 0.5, %v1410
        %v1412 = vsub.f32 1.5, %v1411
        %v1413 = vmul.f32 %v1408, %v1412
        %vm1414 = vweird.f32 %v1173
        %vm1415 = vweird.f32 %v1408
        %vm1416 = vmor %vm1414, %vm1415
        %v1417 = vsel %vm1416, %v1408, %v1413
        %v1418 = vrsqrt.pop %v1174
        %v1419 = vmul.f32 %v1418, %v1174
        %v1420 = vmul.f32 %v1419, %v1418
        %v1421 = vmul.f32 0.5, %v1420
        %v1422 = vsub.f32 1.5, %v1421
        %v1423 = vmul.f32 %v1418, %v1422
        %vm1424 = vweird.f32 %v1174
        %vm1425 = vweird.f32 %v1418
        %vm1426 = vmor %vm1424, %vm1425
        %v1427 = vsel %vm1426, %v1418, %v1423
        %v1428 = vrsqrt.pop %v1175
        %v1429 = vmul.f32 %v1428, %v1175
        %v1430 = vmul.f32 %v1429, %v1428
        %v1431 = vmul.f32 0.5, %v1430
        %v1432 = vsub.f32 1.5, %v1431
        %v1433 = vmul.f32 %v1428, %v1432
        %vm1434 = vweird.f32 %v1175
        %vm1435 = vweird.f32 %v1428
        %vm1436 = vmor %vm1434, %vm1435
        %v1437 = vsel %vm1436, %v1428, %v1433
        %v1438 = vrsqrt.pop %v1176
        %v1439 = vmul.f32 %v1438, %v1176
        %v1440 = vmul.f32 %v1439, %v1438
        %v1441 = vmul.f32 0.5, %v1440
        %v1442 = vsub.f32 1.5, %v1441
        %v1443 = vmul.f32 %v1438, %v1442
        %vm1444 = vweird.f32 %v1176
        %vm1445 = vweird.f32 %v1438
        %vm1446 = vmor %vm1444, %vm1445
        %v1447 = vsel %vm1446, %v1438, %v1443
        %v1448 = vrsqrt.pop %v1177
        %v1449 = vmul.f32 %v1448, %v1177
        %v1450 = vmul.f32 %v1449, %v1448
        %v1451 = vmul.f32 0.5, %v1450
        %v1452 = vsub.f32 1.5, %v1451
        %v1453 = vmul.f32 %v1448, %v1452
        %vm1454 = vweird.f32 %v1177
        %vm1455 = vweird.f32 %v1448
        %vm1456 = vmor %vm1454, %vm1455
        %v1457 = vsel %vm1456, %v1448, %v1453
        %v1458 = vrsqrt.pop %v1178
        %v1459 = vmul.f32 %v1458, %v1178
        %v1460 = vmul.f32 %v1459, %v1458
        %v1461 = vmul.f32 0.5, %v1460
        %v1462 = vsub.f32 1.5, %v1461
        %v1463 = vmul.f32 %v1458, %v1462
        %vm1464 = vweird.f32 %v1178
        %vm1465 = vweird.f32 %v1458
        %vm1466 = vmor %vm1464, %vm1465
        %v1467 = vsel %vm1466, %v1458, %v1463
        %v1468 = vrsqrt.pop %v1179
        %v1469 = vmul.f32 %v1468, %v1179
        %v1470 = vmul.f32 %v1469, %v1468
        %v1471 = vmul.f32 0.5, %v1470
        %v1472 = vsub.f32 1.5, %v1471
        %v1473 = vmul.f32 %v1468, %v1472
        %vm1474 = vweird.f32 %v1179
        %vm1475 = vweird.f32 %v1468
        %vm1476 = vmor %vm1474, %vm1475
        %v1477 = vsel %vm1476, %v1468, %v1473
        %v1478 = vrsqrt.pop %v1180
        %v1479 = vmul.f32 %v1478, %v1180
        %v1480 = vmul.f32 %v1479, %v1478
        %v1481 = vmul.f32 0.5, %v1480
        %v1482 = vsub.f32 1.5, %v1481
        %v1483 = vmul.f32 %v1478, %v1482
        %vm1484 = vweird.f32 %v1180
        %vm1485 = vweird.f32 %v1478
        %vm1486 = vmor %vm1484, %vm1485
        %v1487 = vsel %vm1486, %v1478, %v1483
        %v1488 = vrsqrt.pop %v1181
        %v1489 = vmul.f32 %v1488, %v1181
        %v1490 = vmul.f32 %v1489, %v1488
        %v1491 = vmul.f32 0.5, %v1490
        %v1492 = vsub.f32 1.5, %v1491
        %v1493 = vmul.f32 %v1488, %v1492
        %vm1494 = vweird.f32 %v1181
        %vm1495 = vweird.f32 %v1488
        %vm1496 = vmor %vm1494, %vm1495
        %v1497 = vsel %vm1496, %v1488, %v1493
        %v1498 = vrsqrt.pop %v1182
        %v1499 = vmul.f32 %v1498, %v1182
        %v1500 = vmul.f32 %v1499, %v1498
        %v1501 = vmul.f32 0.5, %v1500
        %v1502 = vsub.f32 1.5, %v1501
        %v1503 = vmul.f32 %v1498, %v1502
        %vm1504 = vweird.f32 %v1182
        %vm1505 = vweird.f32 %v1498
        %vm1506 = vmor %vm1504, %vm1505
        %v1507 = vsel %vm1506, %v1498, %v1503
        %v1508 = vrsqrt.pop %v1183
        %v1509 = vmul.f32 %v1508, %v1183
        %v1510 = vmul.f32 %v1509, %v1508
        %v1511 = vmul.f32 0.5, %v1510
        %v1512 = vsub.f32 1.5, %v1511
        %v1513 = vmul.f32 %v1508, %v1512
        %vm1514 = vweird.f32 %v1183
        %vm1515 = vweird.f32 %v1508
        %vm1516 = vmor %vm1514, %vm1515
        %v1517 = vsel %vm1516, %v1508, %v1513
        %v1518 = vrsqrt.pop %v1184
        %v1519 = vmul.f32 %v1518, %v1184
        %v1520 = vmul.f32 %v1519, %v1518
        %v1521 = vmul.f32 0.5, %v1520
        %v1522 = vsub.f32 1.5, %v1521
        %v1523 = vmul.f32 %v1518, %v1522
        %vm1524 = vweird.f32 %v1184
        %vm1525 = vweird.f32 %v1518
        %vm1526 = vmor %vm1524, %vm1525
        %v1527 = vsel %vm1526, %v1518, %v1523
        %v1528 = vrsqrt.pop %v1185
        %v1529 = vmul.f32 %v1528, %v1185
        %v1530 = vmul.f32 %v1529, %v1528
        %v1531 = vmul.f32 0.5, %v1530
        %v1532 = vsub.f32 1.5, %v1531
        %v1533 = vmul.f32 %v1528, %v1532
        %vm1534 = vweird.f32 %v1185
        %vm1535 = vweird.f32 %v1528
        %vm1536 = vmor %vm1534, %vm1535
        %v1537 = vsel %vm1536, %v1528, %v1533
        %v1538 = vrsqrt.pop %v1186
        %v1539 = vmul.f32 %v1538, %v1186
        %v1540 = vmul.f32 %v1539, %v1538
        %v1541 = vmul.f32 0.5, %v1540
        %v1542 = vsub.f32 1.5, %v1541
        %v1543 = vmul.f32 %v1538, %v1542
        %vm1544 = vweird.f32 %v1186
        %vm1545 = vweird.f32 %v1538
        %vm1546 = vmor %vm1544, %vm1545
        %v1547 = vsel %vm1546, %v1538, %v1543
        %v1548 = vrsqrt.pop %v1187
        %v1549 = vmul.f32 %v1548, %v1187
        %v1550 = vmul.f32 %v1549, %v1548
        %v1551 = vmul.f32 0.5, %v1550
        %v1552 = vsub.f32 1.5, %v1551
        %v1553 = vmul.f32 %v1548, %v1552
        %vm1554 = vweird.f32 %v1187
        %vm1555 = vweird.f32 %v1548
        %vm1556 = vmor %vm1554, %vm1555
        %v1557 = vsel %vm1556, %v1548, %v1553
        %v1558 = vrsqrt.pop %v1188
        %v1559 = vmul.f32 %v1558, %v1188
        %v1560 = vmul.f32 %v1559, %v1558
        %v1561 = vmul.f32 0.5, %v1560
        %v1562 = vsub.f32 1.5, %v1561
        %v1563 = vmul.f32 %v1558, %v1562
        %vm1564 = vweird.f32 %v1188
        %vm1565 = vweird.f32 %v1558
        %vm1566 = vmor %vm1564, %vm1565
        %v1567 = vsel %vm1566, %v1558, %v1563
        %v1568 = vrsqrt.pop %v1189
        %v1569 = vmul.f32 %v1568, %v1189
        %v1570 = vmul.f32 %v1569, %v1568
        %v1571 = vmul.f32 0.5, %v1570
        %v1572 = vsub.f32 1.5, %v1571
        %v1573 = vmul.f32 %v1568, %v1572
        %vm1574 = vweird.f32 %v1189
        %vm1575 = vweird.f32 %v1568
        %vm1576 = vmor %vm1574, %vm1575
        %v1577 = vsel %vm1576, %v1568, %v1573
        %v1578 = vrsqrt.pop %v1190
        %v1579 = vmul.f32 %v1578, %v1190
        %v1580 = vmul.f32 %v1579, %v1578
        %v1581 = vmul.f32 0.5, %v1580
        %v1582 = vsub.f32 1.5, %v1581
        %v1583 = vmul.f32 %v1578, %v1582
        %vm1584 = vweird.f32 %v1190
        %vm1585 = vweird.f32 %v1578
        %vm1586 = vmor %vm1584, %vm1585
        %v1587 = vsel %vm1586, %v1578, %v1583
        %v1588 = vrsqrt.pop %v1191
        %v1589 = vmul.f32 %v1588, %v1191
        %v1590 = vmul.f32 %v1589, %v1588
        %v1591 = vmul.f32 0.5, %v1590
        %v1592 = vsub.f32 1.5, %v1591
        %v1593 = vmul.f32 %v1588, %v1592
        %vm1594 = vweird.f32 %v1191
        %vm1595 = vweird.f32 %v1588
        %vm1596 = vmor %vm1594, %vm1595
        %v1597 = vsel %vm1596, %v1588, %v1593
        %v1598 = vrsqrt.pop %v1192
        %v1599 = vmul.f32 %v1598, %v1192
        %v1600 = vmul.f32 %v1599, %v1598
        %v1601 = vmul.f32 0.5, %v1600
        %v1602 = vsub.f32 1.5, %v1601
        %v1603 = vmul.f32 %v1598, %v1602
        %vm1604 = vweird.f32 %v1192
        %vm1605 = vweird.f32 %v1598
        %vm1606 = vmor %vm1604, %vm1605
        %v1607 = vsel %vm1606, %v1598, %v1603
        %v1608 = vrsqrt.pop %v1193
        %v1609 = vmul.f32 %v1608, %v1193
        %v1610 = vmul.f32 %v1609, %v1608
        %v1611 = vmul.f32 0.5, %v1610
        %v1612 = vsub.f32 1.5, %v1611
        %v1613 = vmul.f32 %v1608, %v1612
        %vm1614 = vweird.f32 %v1193
        %vm1615 = vweird.f32 %v1608
        %vm1616 = vmor %vm1614, %vm1615
        %v1617 = vsel %vm1616, %v1608, %v1613
        %v1618 = vrsqrt.pop %v1194
        %v1619 = vmul.f32 %v1618, %v1194
        %v1620 = vmul.f32 %v1619, %v1618
        %v1621 = vmul.f32 0.5, %v1620
        %v1622 = vsub.f32 1.5, %v1621
        %v1623 = vmul.f32 %v1618, %v1622
        %vm1624 = vweird.f32 %v1194
        %vm1625 = vweird.f32 %v1618
        %vm1626 = vmor %vm1624, %vm1625
        %v1627 = vsel %vm1626, %v1618, %v1623
        %v1628 = vrsqrt.pop %v1195
        %v1629 = vmul.f32 %v1628, %v1195
        %v1630 = vmul.f32 %v1629, %v1628
        %v1631 = vmul.f32 0.5, %v1630
        %v1632 = vsub.f32 1.5, %v1631
        %v1633 = vmul.f32 %v1628, %v1632
        %vm1634 = vweird.f32 %v1195
        %vm1635 = vweird.f32 %v1628
        %vm1636 = vmor %vm1634, %vm1635
        %v1637 = vsel %vm1636, %v1628, %v1633
        %v1638 = vrsqrt.pop %v1196
        %v1639 = vmul.f32 %v1638, %v1196
        %v1640 = vmul.f32 %v1639, %v1638
        %v1641 = vmul.f32 0.5, %v1640
        %v1642 = vsub.f32 1.5, %v1641
        %v1643 = vmul.f32 %v1638, %v1642
        %vm1644 = vweird.f32 %v1196
        %vm1645 = vweird.f32 %v1638
        %vm1646 = vmor %vm1644, %vm1645
        %v1647 = vsel %vm1646, %v1638, %v1643
        %v1648 = vrsqrt.pop %v1197
        %v1649 = vmul.f32 %v1648, %v1197
        %v1650 = vmul.f32 %v1649, %v1648
        %v1651 = vmul.f32 0.5, %v1650
        %v1652 = vsub.f32 1.5, %v1651
        %v1653 = vmul.f32 %v1648, %v1652
        %vm1654 = vweird.f32 %v1197
        %vm1655 = vweird.f32 %v1648
        %vm1656 = vmor %vm1654, %vm1655
        %v1657 = vsel %vm1656, %v1648, %v1653
        %v1658 = vrsqrt.pop %v1198
        %v1659 = vmul.f32 %v1658, %v1198
        %v1660 = vmul.f32 %v1659, %v1658
        %v1661 = vmul.f32 0.5, %v1660
        %v1662 = vsub.f32 1.5, %v1661
        %v1663 = vmul.f32 %v1658, %v1662
        %vm1664 = vweird.f32 %v1198
        %vm1665 = vweird.f32 %v1658
        %vm1666 = vmor %vm1664, %vm1665
        %v1667 = vsel %vm1666, %v1658, %v1663
        %v1668 = vrsqrt.pop %v1199
        %v1669 = vmul.f32 %v1668, %v1199
        %v1670 = vmul.f32 %v1669, %v1668
        %v1671 = vmul.f32 0.5, %v1670
        %v1672 = vsub.f32 1.5, %v1671
        %v1673 = vmul.f32 %v1668, %v1672
        %vm1674 = vweird.f32 %v1199
        %vm1675 = vweird.f32 %v1668
        %vm1676 = vmor %vm1674, %vm1675
        %v1677 = vsel %vm1676, %v1668, %v1673
        %v1678 = vrsqrt.pop %v1200
        %v1679 = vmul.f32 %v1678, %v1200
        %v1680 = vmul.f32 %v1679, %v1678
        %v1681 = vmul.f32 0.5, %v1680
        %v1682 = vsub.f32 1.5, %v1681
        %v1683 = vmul.f32 %v1678, %v1682
        %vm1684 = vweird.f32 %v1200
        %vm1685 = vweird.f32 %v1678
        %vm1686 = vmor %vm1684, %vm1685
        %v1687 = vsel %vm1686, %v1678, %v1683
        %v1688 = vrsqrt.pop %v1201
        %v1689 = vmul.f32 %v1688, %v1201
        %v1690 = vmul.f32 %v1689, %v1688
        %v1691 = vmul.f32 0.5, %v1690
        %v1692 = vsub.f32 1.5, %v1691
        %v1693 = vmul.f32 %v1688, %v1692
        %vm1694 = vweird.f32 %v1201
        %vm1695 = vweird.f32 %v1688
        %vm1696 = vmor %vm1694, %vm1695
        %v1697 = vsel %vm1696, %v1688, %v1693
        %v1698 = vrsqrt.pop %v1202
        %v1699 = vmul.f32 %v1698, %v1202
        %v1700 = vmul.f32 %v1699, %v1698
        %v1701 = vmul.f32 0.5, %v1700
        %v1702 = vsub.f32 1.5, %v1701
        %v1703 = vmul.f32 %v1698, %v1702
        %vm1704 = vweird.f32 %v1202
        %vm1705 = vweird.f32 %v1698
        %vm1706 = vmor %vm1704, %vm1705
        %v1707 = vsel %vm1706, %v1698, %v1703
        %v1708 = vrsqrt.pop %v1203
        %v1709 = vmul.f32 %v1708, %v1203
        %v1710 = vmul.f32 %v1709, %v1708
        %v1711 = vmul.f32 0.5, %v1710
        %v1712 = vsub.f32 1.5, %v1711
        %v1713 = vmul.f32 %v1708, %v1712
        %vm1714 = vweird.f32 %v1203
        %vm1715 = vweird.f32 %v1708
        %vm1716 = vmor %vm1714, %vm1715
        %v1717 = vsel %vm1716, %v1708, %v1713
        %v1718 = vrsqrt.pop %v1204
        %v1719 = vmul.f32 %v1718, %v1204
        %v1720 = vmul.f32 %v1719, %v1718
        %v1721 = vmul.f32 0.5, %v1720
        %v1722 = vsub.f32 1.5, %v1721
        %v1723 = vmul.f32 %v1718, %v1722
        %vm1724 = vweird.f32 %v1204
        %vm1725 = vweird.f32 %v1718
        %vm1726 = vmor %vm1724, %vm1725
        %v1727 = vsel %vm1726, %v1718, %v1723
        %v1728 = vrsqrt.pop %v1205
        %v1729 = vmul.f32 %v1728, %v1205
        %v1730 = vmul.f32 %v1729, %v1728
        %v1731 = vmul.f32 0.5, %v1730
        %v1732 = vsub.f32 1.5, %v1731
        %v1733 = vmul.f32 %v1728, %v1732
        %vm1734 = vweird.f32 %v1205
        %vm1735 = vweird.f32 %v1728
        %vm1736 = vmor %vm1734, %vm1735
        %v1737 = vsel %vm1736, %v1728, %v1733
        %v1738 = vrsqrt.pop %v1206
        %v1739 = vmul.f32 %v1738, %v1206
        %v1740 = vmul.f32 %v1739, %v1738
        %v1741 = vmul.f32 0.5, %v1740
        %v1742 = vsub.f32 1.5, %v1741
        %v1743 = vmul.f32 %v1738, %v1742
        %vm1744 = vweird.f32 %v1206
        %vm1745 = vweird.f32 %v1738
        %vm1746 = vmor %vm1744, %vm1745
        %v1747 = vsel %vm1746, %v1738, %v1743
        %v1748 = vrsqrt.pop %v1207
        %v1749 = vmul.f32 %v1748, %v1207
        %v1750 = vmul.f32 %v1749, %v1748
        %v1751 = vmul.f32 0.5, %v1750
        %v1752 = vsub.f32 1.5, %v1751
        %v1753 = vmul.f32 %v1748, %v1752
        %vm1754 = vweird.f32 %v1207
        %vm1755 = vweird.f32 %v1748
        %vm1756 = vmor %vm1754, %vm1755
        %v1757 = vsel %vm1756, %v1748, %v1753
        %v1758 = vrsqrt.pop %v1208
        %v1759 = vmul.f32 %v1758, %v1208
        %v1760 = vmul.f32 %v1759, %v1758
        %v1761 = vmul.f32 0.5, %v1760
        %v1762 = vsub.f32 1.5, %v1761
        %v1763 = vmul.f32 %v1758, %v1762
        %vm1764 = vweird.f32 %v1208
        %vm1765 = vweird.f32 %v1758
        %vm1766 = vmor %vm1764, %vm1765
        %v1767 = vsel %vm1766, %v1758, %v1763
        %v1768 = vrsqrt.pop %v1209
        %v1769 = vmul.f32 %v1768, %v1209
        %v1770 = vmul.f32 %v1769, %v1768
        %v1771 = vmul.f32 0.5, %v1770
        %v1772 = vsub.f32 1.5, %v1771
        %v1773 = vmul.f32 %v1768, %v1772
        %vm1774 = vweird.f32 %v1209
        %vm1775 = vweird.f32 %v1768
        %vm1776 = vmor %vm1774, %vm1775
        %v1777 = vsel %vm1776, %v1768, %v1773
        %v1778 = vrsqrt.pop %v1210
        %v1779 = vmul.f32 %v1778, %v1210
        %v1780 = vmul.f32 %v1779, %v1778
        %v1781 = vmul.f32 0.5, %v1780
        %v1782 = vsub.f32 1.5, %v1781
        %v1783 = vmul.f32 %v1778, %v1782
        %vm1784 = vweird.f32 %v1210
        %vm1785 = vweird.f32 %v1778
        %vm1786 = vmor %vm1784, %vm1785
        %v1787 = vsel %vm1786, %v1778, %v1783
        %v1788 = vrsqrt.pop %v1211
        %v1789 = vmul.f32 %v1788, %v1211
        %v1790 = vmul.f32 %v1789, %v1788
        %v1791 = vmul.f32 0.5, %v1790
        %v1792 = vsub.f32 1.5, %v1791
        %v1793 = vmul.f32 %v1788, %v1792
        %vm1794 = vweird.f32 %v1211
        %vm1795 = vweird.f32 %v1788
        %vm1796 = vmor %vm1794, %vm1795
        %v1797 = vsel %vm1796, %v1788, %v1793
        %v1798 = vrsqrt.pop %v1212
        %v1799 = vmul.f32 %v1798, %v1212
        %v1800 = vmul.f32 %v1799, %v1798
        %v1801 = vmul.f32 0.5, %v1800
        %v1802 = vsub.f32 1.5, %v1801
        %v1803 = vmul.f32 %v1798, %v1802
        %vm1804 = vweird.f32 %v1212
        %vm1805 = vweird.f32 %v1798
        %vm1806 = vmor %vm1804, %vm1805
        %v1807 = vsel %vm1806, %v1798, %v1803
        %v1808 = vrsqrt.pop %v1213
        %v1809 = vmul.f32 %v1808, %v1213
        %v1810 = vmul.f32 %v1809, %v1808
        %v1811 = vmul.f32 0.5, %v1810
        %v1812 = vsub.f32 1.5, %v1811
        %v1813 = vmul.f32 %v1808, %v1812
        %vm1814 = vweird.f32 %v1213
        %vm1815 = vweird.f32 %v1808
        %vm1816 = vmor %vm1814, %vm1815
        %v1817 = vsel %vm1816, %v1808, %v1813
        %v1818 = vrsqrt.pop %v1214
        %v1819 = vmul.f32 %v1818, %v1214
        %v1820 = vmul.f32 %v1819, %v1818
        %v1821 = vmul.f32 0.5, %v1820
        %v1822 = vsub.f32 1.5, %v1821
        %v1823 = vmul.f32 %v1818, %v1822
        %vm1824 = vweird.f32 %v1214
        %vm1825 = vweird.f32 %v1818
        %vm1826 = vmor %vm1824, %vm1825
        %v1827 = vsel %vm1826, %v1818, %v1823
        %v1828 = vrsqrt.pop %v1215
        %v1829 = vmul.f32 %v1828, %v1215
        %v1830 = vmul.f32 %v1829, %v1828
        %v1831 = vmul.f32 0.5, %v1830
        %v1832 = vsub.f32 1.5, %v1831
        %v1833 = vmul.f32 %v1828, %v1832
        %vm1834 = vweird.f32 %v1215
        %vm1835 = vweird.f32 %v1828
        %vm1836 = vmor %vm1834, %vm1835
        %v1837 = vsel %vm1836, %v1828, %v1833
        %v1838 = vrsqrt.pop %v1216
        %v1839 = vmul.f32 %v1838, %v1216
        %v1840 = vmul.f32 %v1839, %v1838
        %v1841 = vmul.f32 0.5, %v1840
        %v1842 = vsub.f32 1.5, %v1841
        %v1843 = vmul.f32 %v1838, %v1842
        %vm1844 = vweird.f32 %v1216
        %vm1845 = vweird.f32 %v1838
        %vm1846 = vmor %vm1844, %vm1845
        %v1847 = vsel %vm1846, %v1838, %v1843
        %v1848 = vrsqrt.pop %v1217
        %v1849 = vmul.f32 %v1848, %v1217
        %v1850 = vmul.f32 %v1849, %v1848
        %v1851 = vmul.f32 0.5, %v1850
        %v1852 = vsub.f32 1.5, %v1851
        %v1853 = vmul.f32 %v1848, %v1852
        %vm1854 = vweird.f32 %v1217
        %vm1855 = vweird.f32 %v1848
        %vm1856 = vmor %vm1854, %vm1855
        %v1857 = vsel %vm1856, %v1848, %v1853
        %v1858 = vmul.f32 %v771, %v1227
        %v1859 = vmul.f32 %v774, %v1237
        %v1860 = vmul.f32 %v777, %v1247
        %v1861 = vmul.f32 %v780, %v1257
        %v1862 = vmul.f32 %v783, %v1267
        %v1863 = vmul.f32 %v786, %v1277
        %v1864 = vmul.f32 %v789, %v1287
        %v1865 = vmul.f32 %v792, %v1297
        %v1866 = vmul.f32 %v795, %v1307
        %v1867 = vmul.f32 %v798, %v1317
        %v1868 = vmul.f32 %v801, %v1327
        %v1869 = vmul.f32 %v804, %v1337
        %v1870 = vmul.f32 %v807, %v1347
        %v1871 = vmul.f32 %v810, %v1357
        %v1872 = vmul.f32 %v813, %v1367
        %v1873 = vmul.f32 %v816, %v1377
        %v1874 = vmul.f32 %v819, %v1387
        %v1875 = vmul.f32 %v822, %v1397
        %v1876 = vmul.f32 %v825, %v1407
        %v1877 = vmul.f32 %v828, %v1417
        %v1878 = vmul.f32 %v831, %v1427
        %v1879 = vmul.f32 %v834, %v1437
        %v1880 = vmul.f32 %v837, %v1447
        %v1881 = vmul.f32 %v840, %v1457
        %v1882 = vmul.f32 %v843, %v1467
        %v1883 = vmul.f32 %v846, %v1477
        %v1884 = vmul.f32 %v849, %v1487
        %v1885 = vmul.f32 %v852, %v1497
        %v1886 = vmul.f32 %v855, %v1507
        %v1887 = vmul.f32 %v858, %v1517
        %v1888 = vmul.f32 %v861, %v1527
        %v1889 = vmul.f32 %v864, %v1537
        %v1890 = vmul.f32 %v867, %v1547
        %v1891 = vmul.f32 %v870, %v1557
        %v1892 = vmul.f32 %v873, %v1567
        %v1893 = vmul.f32 %v876, %v1577
        %v1894 = vmul.f32 %v879, %v1587
        %v1895 = vmul.f32 %v882, %v1597
        %v1896 = vmul.f32 %v885, %v1607
        %v1897 = vmul.f32 %v888, %v1617
        %v1898 = vmul.f32 %v891, %v1627
        %v1899 = vmul.f32 %v894, %v1637
        %v1900 = vmul.f32 %v897, %v1647
        %v1901 = vmul.f32 %v900, %v1657
        %v1902 = vmul.f32 %v903, %v1667
        %v1903 = vmul.f32 %v906, %v1677
        %v1904 = vmul.f32 %v909, %v1687
        %v1905 = vmul.f32 %v912, %v1697
        %v1906 = vmul.f32 %v915, %v1707
        %v1907 = vmul.f32 %v918, %v1717
        %v1908 = vmul.f32 %v921, %v1727
        %v1909 = vmul.f32 %v924, %v1737
        %v1910 = vmul.f32 %v927, %v1747
        %v1911 = vmul.f32 %v930, %v1757
        %v1912 = vmul.f32 %v933, %v1767
        %v1913 = vmul.f32 %v936, %v1777
        %v1914 = vmul.f32 %v939, %v1787
        %v1915 = vmul.f32 %v942, %v1797
        %v1916 = vmul.f32 %v945, %v1807
        %v1917 = vmul.f32 %v948, %v1817
        %v1918 = vmul.f32 %v951, %v1827
        %v1919 = vmul.f32 %v954, %v1837
        %v1920 = vmul.f32 %v957, %v1847
        %v1921 = vmul.f32 %v960, %v1857
        %v1922 = vmin.f32 %v1858, %v1859
        %v1923 = vmin.f32 %v1922, %v1860
        %v1924 = vmin.f32 %v1923, %v1861
        %v1925 = vmin.f32 %v1924, %v1862
        %v1926 = vmin.f32 %v1925, %v1863
        %v1927 = vmin.f32 %v1926, %v1864
        %v1928 = vmin.f32 %v1927, %v1865
        %v1929 = vrot.slane %v1928, 4
        %v1930 = vmin.f32 %v1928, %v1929
        %v1931 = vrot.slane %v1930, 2
        %v1932 = vmin.f32 %v1930, %v1931
        %v1933 = vrot.slane %v1932, 1
        %v1934 = vmin.f32 %v1932, %v1933
        %v1935 = vmin.f32 %v1866, %v1867
        %v1936 = vmin.f32 %v1935, %v1868
        %v1937 = vmin.f32 %v1936, %v1869
        %v1938 = vmin.f32 %v1937, %v1870
        %v1939 = vmin.f32 %v1938, %v1871
        %v1940 = vmin.f32 %v1939, %v1872
        %v1941 = vmin.f32 %v1940, %v1873
        %v1942 = vrot.slane %v1941, 4
        %v1943 = vmin.f32 %v1941, %v1942
        %v1944 = vrot.slane %v1943, 2
        %v1945 = vmin.f32 %v1943, %v1944
        %v1946 = vrot.slane %v1945, 1
        %v1947 = vmin.f32 %v1945, %v1946
        %v1948 = vmin.f32 %v1874, %v1875
        %v1949 = vmin.f32 %v1948, %v1876
        %v1950 = vmin.f32 %v1949, %v1877
        %v1951 = vmin.f32 %v1950, %v1878
        %v1952 = vmin.f32 %v1951, %v1879
        %v1953 = vmin.f32 %v1952, %v1880
        %v1954 = vmin.f32 %v1953, %v1881
        %v1955 = vrot.slane %v1954, 4
        %v1956 = vmin.f32 %v1954, %v1955
        %v1957 = vrot.slane %v1956, 2
        %v1958 = vmin.f32 %v1956, %v1957
        %v1959 = vrot.slane %v1958, 1
        %v1960 = vmin.f32 %v1958, %v1959
        %v1961 = vmin.f32 %v1882, %v1883
        %v1962 = vmin.f32 %v1961, %v1884
        %v1963 = vmin.f32 %v1962, %v1885
        %v1964 = vmin.f32 %v1963, %v1886
        %v1965 = vmin.f32 %v1964, %v1887
        %v1966 = vmin.f32 %v1965, %v1888
        %v1967 = vmin.f32 %v1966, %v1889
        %v1968 = vrot.slane %v1967, 4
        %v1969 = vmin.f32 %v1967, %v1968
        %v1970 = vrot.slane %v1969, 2
        %v1971 = vmin.f32 %v1969, %v1970
        %v1972 = vrot.slane %v1971, 1
        %v1973 = vmin.f32 %v1971, %v1972
        %v1974 = vmin.f32 %v1890, %v1891
        %v1975 = vmin.f32 %v1974, %v1892
        %v1976 = vmin.f32 %v1975, %v1893
        %v1977 = vmin.f32 %v1976, %v1894
        %v1978 = vmin.f32 %v1977, %v1895
        %v1979 = vmin.f32 %v1978, %v1896
        %v1980 = vmin.f32 %v1979, %v1897
        %v1981 = vrot.slane %v1980, 4
        %v1982 = vmin.f32 %v1980, %v1981
        %v1983 = vrot.slane %v1982, 2
        %v1984 = vmin.f32 %v1982, %v1983
        %v1985 = vrot.slane %v1984, 1
        %v1986 = vmin.f32 %v1984, %v1985
        %v1987 = vmin.f32 %v1898, %v1899
        %v1988 = vmin.f32 %v1987, %v1900
        %v1989 = vmin.f32 %v1988, %v1901
        %v1990 = vmin.f32 %v1989, %v1902
        %v1991 = vmin.f32 %v1990, %v1903
        %v1992 = vmin.f32 %v1991, %v1904
        %v1993 = vmin.f32 %v1992, %v1905
        %v1994 = vrot.slane %v1993, 4
        %v1995 = vmin.f32 %v1993, %v1994
        %v1996 = vrot.slane %v1995, 2
        %v1997 = vmin.f32 %v1995, %v1996
        %v1998 = vrot.slane %v1997, 1
        %v1999 = vmin.f32 %v1997, %v1998
        %v2000 = vmin.f32 %v1906, %v1907
        %v2001 = vmin.f32 %v2000, %v1908
        %v2002 = vmin.f32 %v2001, %v1909
        %v2003 = vmin.f32 %v2002, %v1910
        %v2004 = vmin.f32 %v2003, %v1911
        %v2005 = vmin.f32 %v2004, %v1912
        %v2006 = vmin.f32 %v2005, %v1913
        %v2007 = vrot.slane %v2006, 4
        %v2008 = vmin.f32 %v2006, %v2007
        %v2009 = vrot.slane %v2008, 2
        %v2010 = vmin.f32 %v2008, %v2009
        %v2011 = vrot.slane %v2010, 1
        %v2012 = vmin.f32 %v2010, %v2011
        %v2013 = vmin.f32 %v1914, %v1915
        %v2014 = vmin.f32 %v2013, %v1916
        %v2015 = vmin.f32 %v2014, %v1917
        %v2016 = vmin.f32 %v2015, %v1918
        %v2017 = vmin.f32 %v2016, %v1919
        %v2018 = vmin.f32 %v2017, %v1920
        %v2019 = vmin.f32 %v2018, %v1921
        %v2020 = vrot.slane %v2019, 4
        %v2021 = vmin.f32 %v2019, %v2020
        %v2022 = vrot.slane %v2021, 2
        %v2023 = vmin.f32 %v2021, %v2022
        %v2024 = vrot.slane %v2023, 1
        %v2025 = vmin.f32 %v2023, %v2024
        %v2026 = vsub.f32 0.0, %v1934
        %v2027 = vsub.f32 0.0, %v1947
        %v2028 = vsub.f32 0.0, %v1960
        %v2029 = vsub.f32 0.0, %v1973
        %v2030 = vsub.f32 0.0, %v1986
        %v2031 = vsub.f32 0.0, %v1999
        %v2032 = vsub.f32 0.0, %v2012
        %v2033 = vsub.f32 0.0, %v2025
        %vm2042 = vcmask 1041409
        %v2043 = vsel %vm2042, %v2027, %v2026
        %vm2044 = vcmask 1042434
        %v2045 = vsel %vm2044, %v2028, %v2043
        %vm2046 = vcmask 1043459
        %v2047 = vsel %vm2046, %v2029, %v2045
        %vm2048 = vcmask 1044484
        %v2049 = vsel %vm2048, %v2030, %v2047
        %vm2050 = vcmask 1045509
        %v2051 = vsel %vm2050, %v2031, %v2049
        %vm2052 = vcmask 1046534
        %v2053 = vsel %vm2052, %v2032, %v2051
        %vm2054 = vcmask 1047559
        %v2055 = vsel %vm2054, %v2033, %v2053
        %2057 = vst [vmem:[%s256] sm:$0xff] %v2055
        %v2058 = vmax.f32 %v771, %v774
        %v2059 = vmax.f32 %v2058, %v777
        %v2060 = vmax.f32 %v2059, %v780
        %v2061 = vmax.f32 %v2060, %v783
        %v2062 = vmax.f32 %v2061, %v786
        %v2063 = vmax.f32 %v2062, %v789
        %v2064 = vmax.f32 %v2063, %v792
        %v2065 = vrot.slane %v2064, 4
        %v2066 = vmax.f32 %v2064, %v2065
        %v2067 = vrot.slane %v2066, 2
        %v2068 = vmax.f32 %v2066, %v2067
        %v2069 = vrot.slane %v2068, 1
        %v2070 = vmax.f32 %v2068, %v2069
        %v2071 = vmax.f32 %v795, %v798
        %v2072 = vmax.f32 %v2071, %v801
        %v2073 = vmax.f32 %v2072, %v804
        %v2074 = vmax.f32 %v2073, %v807
        %v2075 = vmax.f32 %v2074, %v810
        %v2076 = vmax.f32 %v2075, %v813
        %v2077 = vmax.f32 %v2076, %v816
        %v2078 = vrot.slane %v2077, 4
        %v2079 = vmax.f32 %v2077, %v2078
        %v2080 = vrot.slane %v2079, 2
        %v2081 = vmax.f32 %v2079, %v2080
        %v2082 = vrot.slane %v2081, 1
        %v2083 = vmax.f32 %v2081, %v2082
        %v2084 = vmax.f32 %v819, %v822
        %v2085 = vmax.f32 %v2084, %v825
        %v2086 = vmax.f32 %v2085, %v828
        %v2087 = vmax.f32 %v2086, %v831
        %v2088 = vmax.f32 %v2087, %v834
        %v2089 = vmax.f32 %v2088, %v837
        %v2090 = vmax.f32 %v2089, %v840
        %v2091 = vrot.slane %v2090, 4
        %v2092 = vmax.f32 %v2090, %v2091
        %v2093 = vrot.slane %v2092, 2
        %v2094 = vmax.f32 %v2092, %v2093
        %v2095 = vrot.slane %v2094, 1
        %v2096 = vmax.f32 %v2094, %v2095
        %v2097 = vmax.f32 %v843, %v846
        %v2098 = vmax.f32 %v2097, %v849
        %v2099 = vmax.f32 %v2098, %v852
        %v2100 = vmax.f32 %v2099, %v855
        %v2101 = vmax.f32 %v2100, %v858
        %v2102 = vmax.f32 %v2101, %v861
        %v2103 = vmax.f32 %v2102, %v864
        %v2104 = vrot.slane %v2103, 4
        %v2105 = vmax.f32 %v2103, %v2104
        %v2106 = vrot.slane %v2105, 2
        %v2107 = vmax.f32 %v2105, %v2106
        %v2108 = vrot.slane %v2107, 1
        %v2109 = vmax.f32 %v2107, %v2108
        %v2110 = vmax.f32 %v867, %v870
        %v2111 = vmax.f32 %v2110, %v873
        %v2112 = vmax.f32 %v2111, %v876
        %v2113 = vmax.f32 %v2112, %v879
        %v2114 = vmax.f32 %v2113, %v882
        %v2115 = vmax.f32 %v2114, %v885
        %v2116 = vmax.f32 %v2115, %v888
        %v2117 = vrot.slane %v2116, 4
        %v2118 = vmax.f32 %v2116, %v2117
        %v2119 = vrot.slane %v2118, 2
        %v2120 = vmax.f32 %v2118, %v2119
        %v2121 = vrot.slane %v2120, 1
        %v2122 = vmax.f32 %v2120, %v2121
        %v2123 = vmax.f32 %v891, %v894
        %v2124 = vmax.f32 %v2123, %v897
        %v2125 = vmax.f32 %v2124, %v900
        %v2126 = vmax.f32 %v2125, %v903
        %v2127 = vmax.f32 %v2126, %v906
        %v2128 = vmax.f32 %v2127, %v909
        %v2129 = vmax.f32 %v2128, %v912
        %v2130 = vrot.slane %v2129, 4
        %v2131 = vmax.f32 %v2129, %v2130
        %v2132 = vrot.slane %v2131, 2
        %v2133 = vmax.f32 %v2131, %v2132
        %v2134 = vrot.slane %v2133, 1
        %v2135 = vmax.f32 %v2133, %v2134
        %v2136 = vmax.f32 %v915, %v918
        %v2137 = vmax.f32 %v2136, %v921
        %v2138 = vmax.f32 %v2137, %v924
        %v2139 = vmax.f32 %v2138, %v927
        %v2140 = vmax.f32 %v2139, %v930
        %v2141 = vmax.f32 %v2140, %v933
        %v2142 = vmax.f32 %v2141, %v936
        %v2143 = vrot.slane %v2142, 4
        %v2144 = vmax.f32 %v2142, %v2143
        %v2145 = vrot.slane %v2144, 2
        %v2146 = vmax.f32 %v2144, %v2145
        %v2147 = vrot.slane %v2146, 1
        %v2148 = vmax.f32 %v2146, %v2147
        %v2149 = vmax.f32 %v939, %v942
        %v2150 = vmax.f32 %v2149, %v945
        %v2151 = vmax.f32 %v2150, %v948
        %v2152 = vmax.f32 %v2151, %v951
        %v2153 = vmax.f32 %v2152, %v954
        %v2154 = vmax.f32 %v2153, %v957
        %v2155 = vmax.f32 %v2154, %v960
        %v2156 = vrot.slane %v2155, 4
        %v2157 = vmax.f32 %v2155, %v2156
        %v2158 = vrot.slane %v2157, 2
        %v2159 = vmax.f32 %v2157, %v2158
        %v2160 = vrot.slane %v2159, 1
        %v2161 = vmax.f32 %v2159, %v2160
        %v2162 = vld [vmem:[%s4] sm:$0xff]
        %v2163 = vld [vmem:[%s4 + $0x8] sm:$0xff]
        %v2164 = vld [vmem:[%s4 + $0x10] sm:$0xff]
        %v2165 = vld [vmem:[%s4 + $0x18] sm:$0xff]
        %v2166 = vld [vmem:[%s4 + $0x20] sm:$0xff]
        %v2167 = vld [vmem:[%s4 + $0x28] sm:$0xff]
        %v2168 = vld [vmem:[%s4 + $0x30] sm:$0xff]
        %v2169 = vld [vmem:[%s4 + $0x38] sm:$0xff]
        %v2170 = vld [vmem:[%s4 + $0x40] sm:$0xff]
        %v2171 = vld [vmem:[%s4 + $0x48] sm:$0xff]
        %v2172 = vld [vmem:[%s4 + $0x50] sm:$0xff]
        %v2173 = vld [vmem:[%s4 + $0x58] sm:$0xff]
        %v2174 = vld [vmem:[%s4 + $0x60] sm:$0xff]
        %v2175 = vld [vmem:[%s4 + $0x68] sm:$0xff]
        %v2176 = vld [vmem:[%s4 + $0x70] sm:$0xff]
        %v2177 = vld [vmem:[%s4 + $0x78] sm:$0xff]
        %v2186 = vsel %vm2042, %v2083, %v2070
        %v2187 = vsel %vm2044, %v2096, %v2186
        %v2188 = vsel %vm2046, %v2109, %v2187
        %v2189 = vsel %vm2048, %v2122, %v2188
        %v2190 = vsel %vm2050, %v2135, %v2189
        %v2191 = vsel %vm2052, %v2148, %v2190
        %v2192 = vsel %vm2054, %v2161, %v2191
        %2194 = vmatpush.msra.mxu0 %v2177
        %2195 = vmatpush.msra.mxu0 %v2176
        %2196 = vmatpush.msra.mxu0 %v2175
        %2197 = vmatpush.msra.mxu0 %v2174
        %2198 = vmatpush.msra.mxu0 %v2173
        %2199 = vmatpush.msra.mxu0 %v2172
        %2200 = vmatpush.msra.mxu0 %v2171
        %2201 = vmatpush.msra.mxu0 %v2170
        %2202 = vmatpush.msra.mxu0 %v2169
        %2203 = vmatpush.msra.mxu0 %v2168
        %2204 = vmatpush.msra.mxu0 %v2167
        %2205 = vmatpush.msra.mxu0 %v2166
        %2206 = vmatpush.msra.mxu0 %v2165
        %2207 = vmatpush.msra.mxu0 %v2164
        %2208 = vmatpush.msra.mxu0 %v2163
        %2209 = vmatpush.msra.mxu0 %v2162
        %2210 = vmatmul.f32.gmra.mxu0 %v2192
        %v2211 = vpop.f32.mrf.mxu0
        %v2212 = vadd.f32 0.0, %v2211
        %2213 = vdwg.mxu0
        %2214 = vst [vmem:[%s249] sm:$0xff] %v2212
        %s2215 = sand.u32 %s142, 1
        %s2216 = scalar_lea.sflag [#allocation3], %s2215
        %s2217 = sand.u32 %s142, 1
        %s2218 = smul.addr %s2217, 8
        %s2219 = scalar_lea.vmem [#allocation2], %s2218
        %s2220 = sand.u32 %s168, 1
        %s2221 = scalar_lea.sflag [#allocation5], %s2220
        %s2222 = sand.u32 %s168, 1
        %s2223 = smul.addr %s2222, 8
        %s2224 = scalar_lea.vmem [#allocation4], %s2223
        // Predicated region
        $region41: #{tpu_custom_call.1} parent=39 // pred_check
          %p2225 = pneg %p152
        $region42: #{tpu_custom_call.1} parent=39 // pred_check_branch
          %2227 = sbr.rel (%p2225) target = $region44
        $region43: #{tpu_custom_call.1} parent=39 // pred_region
          %2229 = vsyncadd %s2216, 0
          %s2230 = smul.addr %s24, 8
          %s2231 = scalar_lea.hbm %s5, %s2230
          %s2233 = sshll.u32 %s2219, 4
          %s2234 = int_to_ptr.vmem [resolvable:$true] %s2233
          %s2235 = sshll.u32 %s2231, 4
          %s2236 = int_to_ptr.hbm [resolvable:$true] %s2235
          %2238 = dma.vmem_to_hbm [thread:$0]  %s2234, 128, %s2236, %s2216
        $region44: #{tpu_custom_call.1} parent=39 // pred_fallthru
          _
        // Predicated region
        $region45: #{tpu_custom_call.1} parent=39 // pred_check
          %p2239 = pneg %p178
        $region46: #{tpu_custom_call.1} parent=39 // pred_check_branch
          %2241 = sbr.rel (%p2239) target = $region48
        $region47: #{tpu_custom_call.1} parent=39 // pred_region
          %2243 = vsyncadd %s2221, 0
          %s2244 = smul.addr %s24, 8
          %s2245 = scalar_lea.hbm %s6, %s2244
          %s2247 = sshll.u32 %s2224, 4
          %s2248 = int_to_ptr.vmem [resolvable:$true] %s2247
          %s2249 = sshll.u32 %s2245, 4
          %s2250 = int_to_ptr.hbm [resolvable:$true] %s2249
          %2252 = dma.vmem_to_hbm [thread:$0]  %s2248, 128, %s2250, %s2221
        $region48: #{tpu_custom_call.1} parent=39 // pred_fallthru
          _
      $region40: #{tpu_custom_call.1} parent=5 // pred_fallthru
        _
      %p2253 = scmp.le.s32.totalorder 2, %s19
      // Predicated region
      $region49: #{tpu_custom_call.1} parent=5 // pred_check
        %p2254 = pneg %p2253
      $region50: #{tpu_custom_call.1} parent=5 // pred_check_branch
        %2256 = sbr.rel (%p2254) target = $region52
      $region51: #{tpu_custom_call.1} parent=5 // pred_region
        %s2257 = ssub.s32 %s19, 2
        // Predicated region
        $region53: #{tpu_custom_call.1} parent=51 // pred_check
          %p2258 = pneg %p158
        $region54: #{tpu_custom_call.1} parent=51 // pred_check_branch
          %2260 = sbr.rel (%p2258) target = $region56
        $region55: #{tpu_custom_call.1} parent=51 // pred_region
          %s2261 = sand.u32 %s143, 1
          %s2262 = scalar_lea.sflag [#allocation3], %s2261
          %s2263 = sand.u32 %s143, 1
          %s2264 = smul.addr %s2263, 8
          %s2265 = scalar_lea.vmem [#allocation2], %s2264
          %2267 = dma.done %s2262, 128
        $region56: #{tpu_custom_call.1} parent=51 // pred_fallthru
          _
        // Predicated region
        $region57: #{tpu_custom_call.1} parent=51 // pred_check
          %p2268 = pneg %p184
        $region58: #{tpu_custom_call.1} parent=51 // pred_check_branch
          %2270 = sbr.rel (%p2268) target = $region60
        $region59: #{tpu_custom_call.1} parent=51 // pred_region
          %s2271 = sand.u32 %s169, 1
          %s2272 = scalar_lea.sflag [#allocation5], %s2271
          %s2273 = sand.u32 %s169, 1
          %s2274 = smul.addr %s2273, 8
          %s2275 = scalar_lea.vmem [#allocation4], %s2274
          %2277 = dma.done %s2272, 128
        $region60: #{tpu_custom_call.1} parent=51 // pred_fallthru
          _
      $region52: #{tpu_custom_call.1} parent=5 // pred_fallthru
        _
    $region6: #{tpu_custom_call.1} parent=1 // loop_footer
      %s23 = sadd.s32 1, %s19
    $region7: #{tpu_custom_call.1} parent=1 // loop_footer_branch
      %18 = sbr.rel target = $region3
    $region8: #{tpu_custom_call.1} parent=1 // loop_exit
      _
    %2278 = vsyncpa [#allocation3], 1
    %s2279 = scalar_lea.sflag [#allocation3], 1
    %2280 = vsyncpa %s2279, 1
    %2281 = vsyncpa [#allocation5], 1
    %s2282 = scalar_lea.sflag [#allocation5], 1
    %2283 = vsyncpa %s2282, 1

</llo_original>
